<compile_context>
chip_gen: v7x
topology: tpu7x:2x2x1
jax: 0.10.0
libtpu: 0.0.40
codegen_flags: <defaults>
</compile_context>

<pallas_src>
import functools

import jax
import jax.numpy as jnp
from jax import lax
from jax.experimental import pallas as pl
from jax.experimental.pallas import tpu as pltpu

_VMEM_LIMIT = 48 * 1024 * 1024  # safe on v7x (64 MiB physical), ample on v5e/v6e


def _round_up(x, m):
    return ((x + m - 1) // m) * m


# ----------------------------------------------------------------------------
# Kernel 1: point feature MLP (CylindricalPointEncoder hot path)
#   9 -> 64 -> 128 -> 256 -> (256->16 fused with the compression layer)
# ----------------------------------------------------------------------------
def point_mlp_kernel(x_ref, w1, b1, w2, b2, w3, b3, wf, bf_, out_ref):
    # Layer 1 stays in f32: raw metric coordinates, <1% of post-fusion FLOPs.
    x = x_ref[...]
    h = jnp.dot(x, w1[...], preferred_element_type=jnp.float32)
    h = jnp.maximum(h + b1[...], 0.0).astype(jnp.bfloat16)

    def layer(h, w_ref, b_ref):
        y = jnp.dot(h, w_ref[...], preferred_element_type=jnp.float32)
        return jnp.maximum(y + b_ref[...], 0.0).astype(jnp.bfloat16)

    h = layer(h, w2, b2)                      # 64 -> 128
    h = layer(h, w3, b3)                      # 128 -> 256
    # Fused (linear layer 4 @ compression): 256 -> 16, then ReLU.
    y = jnp.dot(h, wf[...], preferred_element_type=jnp.float32) + bf_[...]
    out_ref[...] = jnp.maximum(y, 0.0).astype(out_ref.dtype)


def point_encoder_pallas(feats, params, *, tile_n=4096):
    n, in_dim = feats.shape
    comp_dim = params[-1].shape[-1]

    # cdiv-style grid with wrapper-side padding (no divisibility assert).
    tile_n = min(tile_n, _round_up(n, 256))
    n_pad = _round_up(n, tile_n)
    if n_pad != n:
        feats = jnp.pad(feats, ((0, n_pad - n), (0, 0)))

    weights = params[0::2]
    flops = sum(2 * n_pad * w.shape[0] * w.shape[1] for w in weights)
    bytes_accessed = (n_pad * in_dim * feats.dtype.itemsize
                      + n_pad * comp_dim * 2
                      + sum(p.size * p.dtype.itemsize for p in params))
    cost = pl.CostEstimate(flops=flops, transcendentals=0,
                           bytes_accessed=bytes_accessed)

    full = lambda arr: pl.BlockSpec(arr.shape, lambda i: (0, 0))
    in_specs = [pl.BlockSpec((tile_n, in_dim), lambda i: (i, 0))]
    in_specs += [full(p) for p in params]

    out = pl.pallas_call(
        point_mlp_kernel,
        out_shape=jax.ShapeDtypeStruct((n_pad, comp_dim), jnp.bfloat16),
        grid_spec=pltpu.PrefetchScalarGridSpec(
            num_scalar_prefetch=0,
            grid=(n_pad // tile_n,),
            in_specs=in_specs,
            out_specs=pl.BlockSpec((tile_n, comp_dim), lambda i: (i, 0)),
        ),
        compiler_params=pltpu.CompilerParams(
            dimension_semantics=("parallel",),
            vmem_limit_bytes=_VMEM_LIMIT),
        cost_estimate=cost,
    )(feats, *params)
    return out[:n]


# ----------------------------------------------------------------------------
# Kernel 2: voxel segmentation head (SparseVoxelSegmentor hot path)
#   Writes logits class-major (num_classes, tile_m) -> lane-dense stores and
#   the NCDHW transpose is fused into the kernel.  bf16 output (mem-bound).
# ----------------------------------------------------------------------------
def voxel_head_kernel(v_ref, w1, b1, w2t, b2t, out_ref):
    v = v_ref[0]                                           # (tile_m, C) bf16
    h = jnp.dot(v, w1[...], preferred_element_type=jnp.float32) + b1[...]
    h = jnp.maximum(h, 0.0).astype(jnp.bfloat16)           # (tile_m, 32)
    # (num_classes, tile_m) = w2t (nc, K) contracted with h (tile_m, K) on K
    # -> output already transposed, lane dim = tile_m (multiple of 128).
    logits_t = lax.dot_general(
        w2t[...], h,
        dimension_numbers=(((1,), (1,)), ((), ())),
        preferred_element_type=jnp.float32) + b2t[...]
    out_ref[0] = logits_t.astype(out_ref.dtype)


def voxel_segmentor_pallas(voxel_feats, params, *, tile_m=16384):
    """voxel_feats: (B, M, C) -> logits (B, num_classes, M), bf16."""
    bsz, m, c_in = voxel_feats.shape
    w1, b1, w2t, b2t = params
    hidden = w1.shape[1]
    num_classes = w2t.shape[0]

    tile_m = min(tile_m, _round_up(m, 512))
    m_pad = _round_up(m, tile_m)
    if m_pad != m:
        voxel_feats = jnp.pad(voxel_feats, ((0, 0), (0, m_pad - m), (0, 0)))

    flops = 2 * bsz * m_pad * (c_in * hidden + hidden * num_classes)
    bytes_accessed = (bsz * m_pad * c_in * voxel_feats.dtype.itemsize
                      + bsz * m_pad * num_classes * 2
                      + sum(p.size * p.dtype.itemsize for p in params))
    cost = pl.CostEstimate(flops=flops, transcendentals=0,
                           bytes_accessed=bytes_accessed)

    full = lambda arr: pl.BlockSpec(arr.shape, lambda b, t: (0, 0))
    in_specs = [pl.BlockSpec((1, tile_m, c_in), lambda b, t: (b, t, 0))]
    in_specs += [full(p) for p in params]

    out = pl.pallas_call(
        voxel_head_kernel,
        out_shape=jax.ShapeDtypeStruct((bsz, num_classes, m_pad),
                                       jnp.bfloat16),
        grid_spec=pltpu.PrefetchScalarGridSpec(
            num_scalar_prefetch=0,
            grid=(bsz, m_pad // tile_m),
            in_specs=in_specs,
            out_specs=pl.BlockSpec((1, num_classes, tile_m),
                                   lambda b, t: (b, 0, t)),
        ),
        compiler_params=pltpu.CompilerParams(
            dimension_semantics=("parallel", "parallel"),
            vmem_limit_bytes=_VMEM_LIMIT),
        cost_estimate=cost,
    )(voxel_feats, *params)
    return out[:, :, :m]


# ----------------------------------------------------------------------------
# Parameter construction (deterministic, synthetic).
#   - layer-1 weight kept f32 (raw-input precision)
#   - layer-4 and the compression layer fused in f32, cast to bf16 once
#   - remaining weights bf16, biases f32
# ----------------------------------------------------------------------------
def _linear_params_f32(key, fan_in, fan_out):
    kw, kb = jax.random.split(key)
    scale = 1.0 / jnp.sqrt(jnp.float32(fan_in))
    w = jax.random.normal(kw, (fan_in, fan_out), jnp.float32) * scale
    b = jax.random.normal(kb, (1, fan_out), jnp.float32) * 0.01
    return w, b


def make_params(key, input_dim=9, feat_projection_dim=16, out_feature_dim=256,
                init_size=32, num_classes=4):
    keys = jax.random.split(key, 7)
    # point encoder MLP: 9 -> 64 -> 128 -> 256 -> 256, compress -> 16
    w1, b1 = _linear_params_f32(keys[0], input_dim, 64)
    w2, b2 = _linear_params_f32(keys[1], 64, 128)
    w3, b3 = _linear_params_f32(keys[2], 128, out_feature_dim)
    w4, b4 = _linear_params_f32(keys[3], out_feature_dim, out_feature_dim)
    wc, bc = _linear_params_f32(keys[4], out_feature_dim, feat_projection_dim)
    # Layer 4 has no nonlinearity before the compression layer -> fuse them
    # algebraically in f32 (single bf16 rounding of the fused weight).
    w_fused = (w4 @ wc).astype(jnp.bfloat16)         # (256, 16)
    b_fused = b4 @ wc + bc                            # (1, 16) f32
    encoder_params = (
        w1, b1,                                       # f32 first layer
        w2.astype(jnp.bfloat16), b2,
        w3.astype(jnp.bfloat16), b3,
        w_fused, b_fused,
    )

    # voxel segmentor head: 16 -> init_size -> num_classes.
    # Final layer stored transposed ((nc, hidden) weight, (nc, 1) bias) so the
    # kernel can emit a lane-dense class-major block directly.
    wv1, bv1 = _linear_params_f32(keys[5], feat_projection_dim, init_size)
    wv2, bv2 = _linear_params_f32(keys[6], init_size, num_classes)
    segmentor_params = (wv1.astype(jnp.bfloat16), bv1,
                        wv2.T.astype(jnp.bfloat16),
                        bv2.reshape(num_classes, 1))
    return encoder_params, segmentor_params


# ----------------------------------------------------------------------------
# Full Cylinder3D forward
# ----------------------------------------------------------------------------
@functools.partial(jax.jit, static_argnames=("batch_size", "voxel_dim",
                                             "num_classes"))
def cylinder3d_forward(feats, coords, encoder_params, segmentor_params,
                       *, batch_size, voxel_dim, num_classes):
    """
    Args:
      feats:  (N, 9)  float32 point features
      coords: (N, 4)  int32   [batch_idx, r, theta, z] voxel indices
    Returns:
      (B, num_classes, D, H, W) bfloat16 logits
    """
    d, h, w = voxel_dim
    comp_dim = encoder_params[-1].shape[-1]

    # 1. per-point feature extraction (Pallas kernel, bf16 MXU / f32 acc)
    point_features = point_encoder_pallas(feats, encoder_params)  # (N, 16) bf16

    # 2. max-pool point features directly into the dense cylindrical voxel
    #    grid via scatter-max (no argsort / gather).  The grid is
    #    zero-initialized and features are post-ReLU (>= 0), so empty voxels
    #    stay 0, matching the dense zero-initialized PyTorch grid.
    # TODO(synk): a Pallas scatter-max kernel (scalar-prefetched voxel ids +
    # manual DMA) would replace this remaining XLA scatter at very large N.
    b_idx, xi, yi, zi = coords[:, 0], coords[:, 1], coords[:, 2], coords[:, 3]
    vox_id = ((b_idx * d + xi) * h + yi) * w + zi
    grid = jnp.zeros((batch_size * d * h * w, comp_dim), jnp.bfloat16)
    pooled = grid.at[vox_id].max(point_features)
    voxel_feats = pooled.reshape(batch_size, d * h * w, comp_dim)

    # 3. dense per-voxel segmentation head (Pallas kernel, class-major bf16)
    logits = voxel_segmentor_pallas(voxel_feats, segmentor_params)  # (B,nc,DHW)
    return logits.reshape(batch_size, num_classes, d, h, w)


if __name__ == "__main__":
    key = jax.random.PRNGKey(0)
    k_feat, k_coord, k_param = jax.random.split(key, 3)

    batch_size = 2
    num_points = 256
    voxel_dim = (8, 8, 8)     # (D, H, W) cylindrical grid
    num_classes = 4
    cfg = {"feature_compression": 16}

    feats = jax.random.normal(k_feat, (num_points, 9), jnp.float32)
    kb, kx, ky, kz = jax.random.split(k_coord, 4)
    coords = jnp.stack([
        jax.random.randint(kb, (num_points,), 0, batch_size),
        jax.random.randint(kx, (num_points,), 0, voxel_dim[0]),
        jax.random.randint(ky, (num_points,), 0, voxel_dim[1]),
        jax.random.randint(kz, (num_points,), 0, voxel_dim[2]),
    ], axis=1).astype(jnp.int32)

    encoder_params, segmentor_params = make_params(
        k_param,
        input_dim=9,
        feat_projection_dim=cfg["feature_compression"],
        out_feature_dim=256,
        init_size=32,
        num_classes=num_classes,
    )

    out = cylinder3d_forward(
        feats, coords, encoder_params, segmentor_params,
        batch_size=batch_size, voxel_dim=voxel_dim, num_classes=num_classes)
    out = jax.block_until_ready(out)

    assert out.shape == (batch_size, num_classes, *voxel_dim), out.shape
    assert out.dtype == jnp.bfloat16
    assert bool(jnp.all(jnp.isfinite(out.astype(jnp.float32))))
    print("KERNEL_OK")
</pallas_src>

<mosaic_0001>
module attributes {stable_mosaic.version = 11 : i64} {
  func.func @point_mlp_kernel(%arg0: i32, %arg1: memref<256x9xf32, #tpu.memory_space<vmem>>, %arg2: memref<9x64xf32, #tpu.memory_space<vmem>>, %arg3: memref<1x64xf32, #tpu.memory_space<vmem>>, %arg4: memref<64x128xbf16, #tpu.memory_space<vmem>>, %arg5: memref<1x128xf32, #tpu.memory_space<vmem>>, %arg6: memref<128x256xbf16, #tpu.memory_space<vmem>>, %arg7: memref<1x256xf32, #tpu.memory_space<vmem>>, %arg8: memref<256x16xbf16, #tpu.memory_space<vmem>>, %arg9: memref<1x16xf32, #tpu.memory_space<vmem>>, %arg10: memref<256x16xbf16, #tpu.memory_space<vmem>>) attributes {dimension_semantics = [#tpu.dimension_semantics<parallel>], iteration_bounds = array<i64: 1>, scalar_prefetch = 0 : i64, scratch_operands = 0 : i64, tpu.core_type = #tpu.core_type<tc>, window_params = [{transform_indices = @transform_0, window_bounds = array<i64: 256, 9>}, {pipeline_mode = #tpu.pipeline_mode<synchronous>, transform_indices = @transform_1, window_bounds = array<i64: 9, 64>}, {pipeline_mode = #tpu.pipeline_mode<synchronous>, transform_indices = @transform_2, window_bounds = array<i64: 1, 64>}, {pipeline_mode = #tpu.pipeline_mode<synchronous>, transform_indices = @transform_3, window_bounds = array<i64: 64, 128>}, {pipeline_mode = #tpu.pipeline_mode<synchronous>, transform_indices = @transform_4, window_bounds = array<i64: 1, 128>}, {pipeline_mode = #tpu.pipeline_mode<synchronous>, transform_indices = @transform_5, window_bounds = array<i64: 128, 256>}, {pipeline_mode = #tpu.pipeline_mode<synchronous>, transform_indices = @transform_6, window_bounds = array<i64: 1, 256>}, {pipeline_mode = #tpu.pipeline_mode<synchronous>, transform_indices = @transform_7, window_bounds = array<i64: 256, 16>}, {pipeline_mode = #tpu.pipeline_mode<synchronous>, transform_indices = @transform_8, window_bounds = array<i64: 1, 16>}, {transform_indices = @transform_9, window_bounds = array<i64: 256, 16>}]} {
    %c0 = arith.constant 0 : index
    %c0_0 = arith.constant 0 : index
    %0 = vector.load %arg1[%c0, %c0_0] : memref<256x9xf32, #tpu.memory_space<vmem>>, vector<256x9xf32>
    %c0_1 = arith.constant 0 : index
    %c0_2 = arith.constant 0 : index
    %1 = vector.load %arg2[%c0_1, %c0_2] : memref<9x64xf32, #tpu.memory_space<vmem>>, vector<9x64xf32>
    %cst = arith.constant dense<0.000000e+00> : vector<256x64xf32>
    %2 = tpu.matmul %0, %1, %cst {dimension_numbers = #tpu.dot_dimension_numbers<[1], [0], [0], [1], [0, 0, 1, 1], [], []>} : vector<256x9xf32>, vector<9x64xf32>, vector<256x64xf32> -> vector<256x64xf32>
    %c0_3 = arith.constant 0 : index
    %c0_4 = arith.constant 0 : index
    %3 = vector.load %arg3[%c0_3, %c0_4] : memref<1x64xf32, #tpu.memory_space<vmem>>, vector<1x64xf32>
    %4 = vector.broadcast %3 : vector<1x64xf32> to vector<256x64xf32>
    %5 = arith.addf %2, %4 : vector<256x64xf32>
    %cst_5 = arith.constant 0.000000e+00 : f32
    %6 = vector.broadcast %cst_5 : f32 to vector<256x64xf32>
    %7 = arith.maximumf %5, %6 : vector<256x64xf32>
    %8 = arith.truncf %7 : vector<256x64xf32> to vector<256x64xbf16>
    %c0_6 = arith.constant 0 : index
    %c0_7 = arith.constant 0 : index
    %9 = vector.load %arg4[%c0_6, %c0_7] : memref<64x128xbf16, #tpu.memory_space<vmem>>, vector<64x128xbf16>
    %cst_8 = arith.constant dense<0.000000e+00> : vector<256x128xf32>
    %10 = tpu.matmul %8, %9, %cst_8 {dimension_numbers = #tpu.dot_dimension_numbers<[1], [0], [0], [1], [0, 0, 1, 1], [], []>} : vector<256x64xbf16>, vector<64x128xbf16>, vector<256x128xf32> -> vector<256x128xf32>
    %c0_9 = arith.constant 0 : index
    %c0_10 = arith.constant 0 : index
    %11 = vector.load %arg5[%c0_9, %c0_10] : memref<1x128xf32, #tpu.memory_space<vmem>>, vector<1x128xf32>
    %12 = vector.broadcast %11 : vector<1x128xf32> to vector<256x128xf32>
    %13 = arith.addf %10, %12 : vector<256x128xf32>
    %cst_11 = arith.constant 0.000000e+00 : f32
    %14 = vector.broadcast %cst_11 : f32 to vector<256x128xf32>
    %15 = arith.maximumf %13, %14 : vector<256x128xf32>
    %16 = arith.truncf %15 : vector<256x128xf32> to vector<256x128xbf16>
    %c0_12 = arith.constant 0 : index
    %c0_13 = arith.constant 0 : index
    %17 = vector.load %arg6[%c0_12, %c0_13] : memref<128x256xbf16, #tpu.memory_space<vmem>>, vector<128x256xbf16>
    %cst_14 = arith.constant dense<0.000000e+00> : vector<256x256xf32>
    %18 = tpu.matmul %16, %17, %cst_14 {dimension_numbers = #tpu.dot_dimension_numbers<[1], [0], [0], [1], [0, 0, 1, 1], [], []>} : vector<256x128xbf16>, vector<128x256xbf16>, vector<256x256xf32> -> vector<256x256xf32>
    %c0_15 = arith.constant 0 : index
    %c0_16 = arith.constant 0 : index
    %19 = vector.load %arg7[%c0_15, %c0_16] : memref<1x256xf32, #tpu.memory_space<vmem>>, vector<1x256xf32>
    %20 = vector.broadcast %19 : vector<1x256xf32> to vector<256x256xf32>
    %21 = arith.addf %18, %20 : vector<256x256xf32>
    %cst_17 = arith.constant 0.000000e+00 : f32
    %22 = vector.broadcast %cst_17 : f32 to vector<256x256xf32>
    %23 = arith.maximumf %21, %22 : vector<256x256xf32>
    %24 = arith.truncf %23 : vector<256x256xf32> to vector<256x256xbf16>
    %c0_18 = arith.constant 0 : index
    %c0_19 = arith.constant 0 : index
    %25 = vector.load %arg8[%c0_18, %c0_19] : memref<256x16xbf16, #tpu.memory_space<vmem>>, vector<256x16xbf16>
    %cst_20 = arith.constant dense<0.000000e+00> : vector<256x16xf32>
    %26 = tpu.matmul %24, %25, %cst_20 {dimension_numbers = #tpu.dot_dimension_numbers<[1], [0], [0], [1], [0, 0, 1, 1], [], []>} : vector<256x256xbf16>, vector<256x16xbf16>, vector<256x16xf32> -> vector<256x16xf32>
    %c0_21 = arith.constant 0 : index
    %c0_22 = arith.constant 0 : index
    %27 = vector.load %arg9[%c0_21, %c0_22] : memref<1x16xf32, #tpu.memory_space<vmem>>, vector<1x16xf32>
    %28 = vector.broadcast %27 : vector<1x16xf32> to vector<256x16xf32>
    %29 = arith.addf %26, %28 : vector<256x16xf32>
    %cst_23 = arith.constant 0.000000e+00 : f32
    %30 = vector.broadcast %cst_23 : f32 to vector<256x16xf32>
    %31 = arith.maximumf %29, %30 : vector<256x16xf32>
    %32 = arith.truncf %31 : vector<256x16xf32> to vector<256x16xbf16>
    %c0_24 = arith.constant 0 : index
    %c0_25 = arith.constant 0 : index
    %33 = vector.load %arg10[%c0_24, %c0_25] : memref<256x16xbf16, #tpu.memory_space<vmem>>, vector<256x16xbf16>
    tpu.vector_store %arg10[%c0_24, %c0_25], %32 {strides = array<i32>} : memref<256x16xbf16, #tpu.memory_space<vmem>>, vector<256x16xbf16>,
    return
  }
  func.func @transform_0(%arg0: i32) -> (i32, i32) {
    %c0_i32 = arith.constant 0 : i32
    %c0_i32_0 = arith.constant 0 : i32
    return %arg0, %c0_i32 : i32, i32
  }
  func.func @transform_1(%arg0: i32) -> (i32, i32) {
    %c0_i32 = arith.constant 0 : i32
    %c0_i32_0 = arith.constant 0 : i32
    %c0_i32_1 = arith.constant 0 : i32
    return %c0_i32, %c0_i32_0 : i32, i32
  }
  func.func @transform_2(%arg0: i32) -> (i32, i32) {
    %c0_i32 = arith.constant 0 : i32
    %c0_i32_0 = arith.constant 0 : i32
    %c0_i32_1 = arith.constant 0 : i32
    return %c0_i32, %c0_i32_0 : i32, i32
  }
  func.func @transform_3(%arg0: i32) -> (i32, i32) {
    %c0_i32 = arith.constant 0 : i32
    %c0_i32_0 = arith.constant 0 : i32
    %c0_i32_1 = arith.constant 0 : i32
    return %c0_i32, %c0_i32_0 : i32, i32
  }
  func.func @transform_4(%arg0: i32) -> (i32, i32) {
    %c0_i32 = arith.constant 0 : i32
    %c0_i32_0 = arith.constant 0 : i32
    %c0_i32_1 = arith.constant 0 : i32
    return %c0_i32, %c0_i32_0 : i32, i32
  }
  func.func @transform_5(%arg0: i32) -> (i32, i32) {
    %c0_i32 = arith.constant 0 : i32
    %c0_i32_0 = arith.constant 0 : i32
    %c0_i32_1 = arith.constant 0 : i32
    return %c0_i32, %c0_i32_0 : i32, i32
  }
  func.func @transform_6(%arg0: i32) -> (i32, i32) {
    %c0_i32 = arith.constant 0 : i32
    %c0_i32_0 = arith.constant 0 : i32
    %c0_i32_1 = arith.constant 0 : i32
    return %c0_i32, %c0_i32_0 : i32, i32
  }
  func.func @transform_7(%arg0: i32) -> (i32, i32) {
    %c0_i32 = arith.constant 0 : i32
    %c0_i32_0 = arith.constant 0 : i32
    %c0_i32_1 = arith.constant 0 : i32
    return %c0_i32, %c0_i32_0 : i32, i32
  }
  func.func @transform_8(%arg0: i32) -> (i32, i32) {
    %c0_i32 = arith.constant 0 : i32
    %c0_i32_0 = arith.constant 0 : i32
    %c0_i32_1 = arith.constant 0 : i32
    return %c0_i32, %c0_i32_0 : i32, i32
  }
  func.func @transform_9(%arg0: i32) -> (i32, i32) {
    %c0_i32 = arith.constant 0 : i32
    %c0_i32_0 = arith.constant 0 : i32
    return %arg0, %c0_i32 : i32, i32
  }
}

module attributes {stable_mosaic.version = 11 : i64} {
  func.func @voxel_head_kernel(%arg0: i32, %arg1: i32, %arg2: memref<1x512x16xbf16, #tpu.memory_space<vmem>>, %arg3: memref<16x32xbf16, #tpu.memory_space<vmem>>, %arg4: memref<1x32xf32, #tpu.memory_space<vmem>>, %arg5: memref<4x32xbf16, #tpu.memory_space<vmem>>, %arg6: memref<4x1xf32, #tpu.memory_space<vmem>>, %arg7: memref<1x4x512xbf16, #tpu.memory_space<vmem>>) attributes {dimension_semantics = [#tpu.dimension_semantics<parallel>, #tpu.dimension_semantics<parallel>], iteration_bounds = array<i64: 2, 1>, scalar_prefetch = 0 : i64, scratch_operands = 0 : i64, tpu.core_type = #tpu.core_type<tc>, window_params = [{transform_indices = @transform_0, window_bounds = array<i64: 1, 512, 16>}, {pipeline_mode = #tpu.pipeline_mode<synchronous>, transform_indices = @transform_1, window_bounds = array<i64: 16, 32>}, {pipeline_mode = #tpu.pipeline_mode<synchronous>, transform_indices = @transform_2, window_bounds = array<i64: 1, 32>}, {pipeline_mode = #tpu.pipeline_mode<synchronous>, transform_indices = @transform_3, window_bounds = array<i64: 4, 32>}, {pipeline_mode = #tpu.pipeline_mode<synchronous>, transform_indices = @transform_4, window_bounds = array<i64: 4, 1>}, {transform_indices = @transform_5, window_bounds = array<i64: 1, 4, 512>}]} {
    %c0 = arith.constant 0 : index
    %c0_0 = arith.constant 0 : index
    %c0_1 = arith.constant 0 : index
    %0 = vector.load %arg2[%c0, %c0_0, %c0_1] : memref<1x512x16xbf16, #tpu.memory_space<vmem>>, vector<1x512x16xbf16>
    %1 = vector.shape_cast %0 : vector<1x512x16xbf16> to vector<512x16xbf16>
    %c0_2 = arith.constant 0 : index
    %c0_3 = arith.constant 0 : index
    %2 = vector.load %arg3[%c0_2, %c0_3] : memref<16x32xbf16, #tpu.memory_space<vmem>>, vector<16x32xbf16>
    %cst = arith.constant dense<0.000000e+00> : vector<512x32xf32>
    %3 = tpu.matmul %1, %2, %cst {dimension_numbers = #tpu.dot_dimension_numbers<[1], [0], [0], [1], [0, 0, 1, 1], [], []>} : vector<512x16xbf16>, vector<16x32xbf16>, vector<512x32xf32> -> vector<512x32xf32>
    %c0_4 = arith.constant 0 : index
    %c0_5 = arith.constant 0 : index
    %4 = vector.load %arg4[%c0_4, %c0_5] : memref<1x32xf32, #tpu.memory_space<vmem>>, vector<1x32xf32>
    %5 = vector.broadcast %4 : vector<1x32xf32> to vector<512x32xf32>
    %6 = arith.addf %3, %5 : vector<512x32xf32>
    %cst_6 = arith.constant 0.000000e+00 : f32
    %7 = vector.broadcast %cst_6 : f32 to vector<512x32xf32>
    %8 = arith.maximumf %6, %7 : vector<512x32xf32>
    %9 = arith.truncf %8 : vector<512x32xf32> to vector<512x32xbf16>
    %c0_7 = arith.constant 0 : index
    %c0_8 = arith.constant 0 : index
    %10 = vector.load %arg5[%c0_7, %c0_8] : memref<4x32xbf16, #tpu.memory_space<vmem>>, vector<4x32xbf16>
    %cst_9 = arith.constant dense<0.000000e+00> : vector<4x512xf32>
    %11 = tpu.matmul %10, %9, %cst_9 {dimension_numbers = #tpu.dot_dimension_numbers<[1], [1], [0], [0], [0, 0, 1, 0], [], []>} : vector<4x32xbf16>, vector<512x32xbf16>, vector<4x512xf32> -> vector<4x512xf32>
    %c0_10 = arith.constant 0 : index
    %c0_11 = arith.constant 0 : index
    %12 = vector.load %arg6[%c0_10, %c0_11] : memref<4x1xf32, #tpu.memory_space<vmem>>, vector<4x1xf32>
    %13 = vector.broadcast %12 : vector<4x1xf32> to vector<4x512xf32>
    %14 = arith.addf %11, %13 : vector<4x512xf32>
    %15 = arith.truncf %14 : vector<4x512xf32> to vector<4x512xbf16>
    %c0_12 = arith.constant 0 : index
    %c0_13 = arith.constant 0 : index
    %c0_14 = arith.constant 0 : index
    %16 = vector.load %arg7[%c0_12, %c0_13, %c0_14] : memref<1x4x512xbf16, #tpu.memory_space<vmem>>, vector<1x4x512xbf16>
    %17 = vector.shape_cast %16 : vector<1x4x512xbf16> to vector<4x512xbf16>
    %18 = vector.shape_cast %15 : vector<4x512xbf16> to vector<1x4x512xbf16>
    tpu.vector_store %arg7[%c0_12, %c0_13, %c0_14], %18 {strides = array<i32>} : memref<1x4x512xbf16, #tpu.memory_space<vmem>>, vector<1x4x512xbf16>,
    return
  }
  func.func @transform_0(%arg0: i32, %arg1: i32) -> (i32, i32, i32) {
    %c0_i32 = arith.constant 0 : i32
    %c0_i32_0 = arith.constant 0 : i32
    return %arg0, %arg1, %c0_i32 : i32, i32, i32
  }
  func.func @transform_1(%arg0: i32, %arg1: i32) -> (i32, i32) {
    %c0_i32 = arith.constant 0 : i32
    %c0_i32_0 = arith.constant 0 : i32
    %c0_i32_1 = arith.constant 0 : i32
    return %c0_i32, %c0_i32_0 : i32, i32
  }
  func.func @transform_2(%arg0: i32, %arg1: i32) -> (i32, i32) {
    %c0_i32 = arith.constant 0 : i32
    %c0_i32_0 = arith.constant 0 : i32
    %c0_i32_1 = arith.constant 0 : i32
    return %c0_i32, %c0_i32_0 : i32, i32
  }
  func.func @transform_3(%arg0: i32, %arg1: i32) -> (i32, i32) {
    %c0_i32 = arith.constant 0 : i32
    %c0_i32_0 = arith.constant 0 : i32
    %c0_i32_1 = arith.constant 0 : i32
    return %c0_i32, %c0_i32_0 : i32, i32
  }
  func.func @transform_4(%arg0: i32, %arg1: i32) -> (i32, i32) {
    %c0_i32 = arith.constant 0 : i32
    %c0_i32_0 = arith.constant 0 : i32
    %c0_i32_1 = arith.constant 0 : i32
    return %c0_i32, %c0_i32_0 : i32, i32
  }
  func.func @transform_5(%arg0: i32, %arg1: i32) -> (i32, i32, i32) {
    %c0_i32 = arith.constant 0 : i32
    %c0_i32_0 = arith.constant 0 : i32
    return %arg0, %c0_i32, %arg1 : i32, i32, i32
  }
}

</mosaic_0001>

<llo_original>
// kernel: cylinder3d_forward.2
$region0: #{cylinder3d_forward.2}
  #allocation0 [shape = 'u32[]', space=smem, size = 0x4, offset = 0x4, fixed_abs, tag = 'smem constant byte address 0x4 - core index']
  #allocation1 [shape = 'u32[144,128]{1,0:T(1,128)}', space=vmem, size = 0x12000, scoped, tag = 'internal scratch']
  %s0 = inlined_call_operand.vmem [shape: f32[256,9], index: 0, kind: input, shape index: {}]
  %s1 = inlined_call_operand.vmem [shape: f32[9,64], index: 1, kind: input, shape index: {}]
  %s2 = inlined_call_operand.vmem [shape: f32[1,64], index: 2, kind: input, shape index: {}]
  %s3 = inlined_call_operand.vmem [shape: bf16[64,128], index: 3, kind: input, shape index: {}]
  %s4 = inlined_call_operand.vmem [shape: f32[1,128], index: 4, kind: input, shape index: {}]
  %s5 = inlined_call_operand.vmem [shape: bf16[128,256], index: 5, kind: input, shape index: {}]
  %s6 = inlined_call_operand.vmem [shape: f32[1,256], index: 6, kind: input, shape index: {}]
  %s7 = inlined_call_operand.vmem [shape: bf16[256,16], index: 7, kind: input, shape index: {}]
  %s8 = inlined_call_operand.vmem [shape: f32[1,16], index: 8, kind: input, shape index: {}]
  %s9 = inlined_call_operand.vmem [shape: bf16[256,16], index: 9, kind: output, shape index: {}]
  %s10 = sld [smem:[#allocation0]]
  $region46: #{cylinder3d_forward.2} parent=0
    _
  %s12 = ssub.s32 1, %s10
  %s13 = scalar_select 0, %s12, %s10
  // Predicated region
  $region2: #{cylinder3d_forward.2} parent=0 // pred_check
    _
  $region3: #{cylinder3d_forward.2} parent=0 // pred_check_branch
    %15 = sbr.rel (0) target = $region5
  $region4: #{cylinder3d_forward.2} parent=0 // pred_region
    _
  $region5: #{cylinder3d_forward.2} parent=0 // pred_fallthru
    _
  // Predicated region
  $region6: #{cylinder3d_forward.2} parent=0 // pred_check
    _
  $region7: #{cylinder3d_forward.2} parent=0 // pred_check_branch
    %17 = sbr.rel (0) target = $region9
  $region8: #{cylinder3d_forward.2} parent=0 // pred_region
    _
  $region9: #{cylinder3d_forward.2} parent=0 // pred_fallthru
    _
  // Predicated region
  $region10: #{cylinder3d_forward.2} parent=0 // pred_check
    _
  $region11: #{cylinder3d_forward.2} parent=0 // pred_check_branch
    %19 = sbr.rel (0) target = $region13
  $region12: #{cylinder3d_forward.2} parent=0 // pred_region
    _
  $region13: #{cylinder3d_forward.2} parent=0 // pred_fallthru
    _
  // Predicated region
  $region14: #{cylinder3d_forward.2} parent=0 // pred_check
    _
  $region15: #{cylinder3d_forward.2} parent=0 // pred_check_branch
    %21 = sbr.rel (0) target = $region17
  $region16: #{cylinder3d_forward.2} parent=0 // pred_region
    _
  $region17: #{cylinder3d_forward.2} parent=0 // pred_fallthru
    _
  // Predicated region
  $region18: #{cylinder3d_forward.2} parent=0 // pred_check
    _
  $region19: #{cylinder3d_forward.2} parent=0 // pred_check_branch
    %23 = sbr.rel (0) target = $region21
  $region20: #{cylinder3d_forward.2} parent=0 // pred_region
    _
  $region21: #{cylinder3d_forward.2} parent=0 // pred_fallthru
    _
  // Predicated region
  $region22: #{cylinder3d_forward.2} parent=0 // pred_check
    _
  $region23: #{cylinder3d_forward.2} parent=0 // pred_check_branch
    %25 = sbr.rel (0) target = $region25
  $region24: #{cylinder3d_forward.2} parent=0 // pred_region
    _
  $region25: #{cylinder3d_forward.2} parent=0 // pred_fallthru
    _
  // Predicated region
  $region26: #{cylinder3d_forward.2} parent=0 // pred_check
    _
  $region27: #{cylinder3d_forward.2} parent=0 // pred_check_branch
    %27 = sbr.rel (0) target = $region29
  $region28: #{cylinder3d_forward.2} parent=0 // pred_region
    _
  $region29: #{cylinder3d_forward.2} parent=0 // pred_fallthru
    _
  // Predicated region
  $region30: #{cylinder3d_forward.2} parent=0 // pred_check
    _
  $region31: #{cylinder3d_forward.2} parent=0 // pred_check_branch
    %29 = sbr.rel (0) target = $region33
  $region32: #{cylinder3d_forward.2} parent=0 // pred_region
    _
  $region33: #{cylinder3d_forward.2} parent=0 // pred_fallthru
    _
  // Predicated region
  $region34: #{cylinder3d_forward.2} parent=0 // pred_check
    _
  $region35: #{cylinder3d_forward.2} parent=0 // pred_check_branch
    %31 = sbr.rel (0) target = $region37
  $region36: #{cylinder3d_forward.2} parent=0 // pred_region
    _
  $region37: #{cylinder3d_forward.2} parent=0 // pred_fallthru
    _
  %v33 = vld [vmem:[%s0] sm:$0xff]
  %v34 = vld [vmem:[%s0 + $0x8] sm:$0xff]
  %v35 = vld [vmem:[%s0 + $0x10] sm:$0xff]
  %v36 = vld [vmem:[%s0 + $0x18] sm:$0xff]
  %v37 = vld [vmem:[%s0 + $0x20] sm:$0xff]
  %v38 = vld [vmem:[%s0 + $0x28] sm:$0xff]
  %v39 = vld [vmem:[%s0 + $0x30] sm:$0xff]
  %v40 = vld [vmem:[%s0 + $0x38] sm:$0xff]
  %v41 = vld [vmem:[%s0 + $0x40] sm:$0xff]
  %v42 = vld [vmem:[%s0 + $0x48] sm:$0xff]
  %v43 = vld [vmem:[%s0 + $0x50] sm:$0xff]
  %v44 = vld [vmem:[%s0 + $0x58] sm:$0xff]
  %v45 = vld [vmem:[%s0 + $0x60] sm:$0xff]
  %v46 = vld [vmem:[%s0 + $0x68] sm:$0xff]
  %v47 = vld [vmem:[%s0 + $0x70] sm:$0xff]
  %v48 = vld [vmem:[%s0 + $0x78] sm:$0xff]
  %v49 = vld [vmem:[%s0 + $0x80] sm:$0xff]
  %v50 = vld [vmem:[%s0 + $0x88] sm:$0xff]
  %v51 = vld [vmem:[%s0 + $0x90] sm:$0xff]
  %v52 = vld [vmem:[%s0 + $0x98] sm:$0xff]
  %v53 = vld [vmem:[%s0 + $0xa0] sm:$0xff]
  %v54 = vld [vmem:[%s0 + $0xa8] sm:$0xff]
  %v55 = vld [vmem:[%s0 + $0xb0] sm:$0xff]
  %v56 = vld [vmem:[%s0 + $0xb8] sm:$0xff]
  %v57 = vld [vmem:[%s0 + $0xc0] sm:$0xff]
  %v58 = vld [vmem:[%s0 + $0xc8] sm:$0xff]
  %v59 = vld [vmem:[%s0 + $0xd0] sm:$0xff]
  %v60 = vld [vmem:[%s0 + $0xd8] sm:$0xff]
  %v61 = vld [vmem:[%s0 + $0xe0] sm:$0xff]
  %v62 = vld [vmem:[%s0 + $0xe8] sm:$0xff]
  %v63 = vld [vmem:[%s0 + $0xf0] sm:$0xff]
  %v64 = vld [vmem:[%s0 + $0xf8] sm:$0xff]
  %v65 = vld [vmem:[%s1] sm:$0xff]
  %v66 = vld [vmem:[%s1 + $0x8] sm:$0x1]
  %v67 = vld [vmem:[%s2] sm:$0x1]
  %v69 = vlaneseq
  %v70 = vshrl.u32 %v69, 7
  %v71 = vsub.s32 0, %v70
  %v72 = vrot.slane %v67, %v71
  %vm74 = vcmask 72704
  %v76 = vsel %vm74, %v33, 0
  %v79 = vsel %vm74, %v34, 0
  %v82 = vsel %vm74, %v35, 0
  %v85 = vsel %vm74, %v36, 0
  %v88 = vsel %vm74, %v37, 0
  %v91 = vsel %vm74, %v38, 0
  %v94 = vsel %vm74, %v39, 0
  %v97 = vsel %vm74, %v40, 0
  %v100 = vsel %vm74, %v41, 0
  %v103 = vsel %vm74, %v42, 0
  %v106 = vsel %vm74, %v43, 0
  %v109 = vsel %vm74, %v44, 0
  %v112 = vsel %vm74, %v45, 0
  %v115 = vsel %vm74, %v46, 0
  %v118 = vsel %vm74, %v47, 0
  %v121 = vsel %vm74, %v48, 0
  %v124 = vsel %vm74, %v49, 0
  %v127 = vsel %vm74, %v50, 0
  %v130 = vsel %vm74, %v51, 0
  %v133 = vsel %vm74, %v52, 0
  %v136 = vsel %vm74, %v53, 0
  %v139 = vsel %vm74, %v54, 0
  %v142 = vsel %vm74, %v55, 0
  %v145 = vsel %vm74, %v56, 0
  %v148 = vsel %vm74, %v57, 0
  %v151 = vsel %vm74, %v58, 0
  %v154 = vsel %vm74, %v59, 0
  %v157 = vsel %vm74, %v60, 0
  %v160 = vsel %vm74, %v61, 0
  %v163 = vsel %vm74, %v62, 0
  %v166 = vsel %vm74, %v63, 0
  %v169 = vsel %vm74, %v64, 0
  %vm171 = vcmask 1040384
  %v173 = vsel %vm171, %v66, 0
  %175 = vmatprep.subr.mxu0 0.0
  %176 = vmatpush1.msra.mxu0 %v65
  %177 = vmatprep.subr.mxu0 0.0
  %178 = vmatpush1.msra.mxu0 %v173
  %179 = vmatprep.subr.mxu0 0.0
  %180 = vmatpush1.msra.mxu0 0.0
  %181 = vmatprep.subr.mxu0 0.0
  %182 = vmatpush1.msra.mxu0 0.0
  %183 = vmatprep.subr.mxu0 0.0
  %184 = vmatpush1.msra.mxu0 0.0
  %185 = vmatprep.subr.mxu0 0.0
  %186 = vmatpush1.msra.mxu0 0.0
  %187 = vmatprep.subr.mxu0 0.0
  %188 = vmatpush1.msra.mxu0 0.0
  %189 = vmatprep.subr.mxu0 0.0
  %190 = vmatpush1.msra.mxu0 0.0
  %191 = vmatprep.subr.mxu0 0.0
  %192 = vmatpush1.msra.mxu0 0.0
  %193 = vmatprep.subr.mxu0 0.0
  %194 = vmatpush1.msra.mxu0 0.0
  %195 = vmatprep.subr.mxu0 0.0
  %196 = vmatpush1.msra.mxu0 0.0
  %197 = vmatprep.subr.mxu0 0.0
  %198 = vmatpush1.msra.mxu0 0.0
  %199 = vmatprep.subr.mxu0 0.0
  %200 = vmatpush1.msra.mxu0 0.0
  %201 = vmatprep.subr.mxu0 0.0
  %202 = vmatpush1.msra.mxu0 0.0
  %203 = vmatprep.subr.mxu0 0.0
  %204 = vmatpush1.msra.mxu0 0.0
  %205 = vmatprep.subr.mxu0 0.0
  %206 = vmatpush1.msra.mxu0 0.0
  %207 = vmatprep.subr.mxu0 0.0
  %208 = vmatpush1.msra.mxu0 0.0
  %209 = vmatprep.subr.mxu0 0.0
  %210 = vmatpush1.msra.mxu0 0.0
  %211 = vmatprep.subr.mxu0 0.0
  %212 = vmatpush1.msra.mxu0 0.0
  %213 = vmatprep.subr.mxu0 0.0
  %214 = vmatpush1.msra.mxu0 0.0
  %215 = vmatprep.subr.mxu0 0.0
  %216 = vmatpush1.msra.mxu0 0.0
  %217 = vmatprep.subr.mxu0 0.0
  %218 = vmatpush1.msra.mxu0 0.0
  %219 = vmatprep.subr.mxu0 0.0
  %220 = vmatpush1.msra.mxu0 0.0
  %221 = vmatprep.subr.mxu0 0.0
  %222 = vmatpush1.msra.mxu0 0.0
  %223 = vmatprep.subr.mxu0 0.0
  %224 = vmatpush1.msra.mxu0 0.0
  %225 = vmatprep.subr.mxu0 0.0
  %226 = vmatpush1.msra.mxu0 0.0
  %227 = vmatprep.subr.mxu0 0.0
  %228 = vmatpush1.msra.mxu0 0.0
  %229 = vmatprep.subr.mxu0 0.0
  %230 = vmatpush1.msra.mxu0 0.0
  %231 = vmatprep.subr.mxu0 0.0
  %232 = vmatpush1.msra.mxu0 0.0
  %233 = vmatprep.subr.mxu0 0.0
  %234 = vmatpush1.msra.mxu0 0.0
  %235 = vmatprep.subr.mxu0 0.0
  %236 = vmatpush1.msra.mxu0 0.0
  %237 = vmatprep.subr.mxu0 0.0
  %238 = vmatpush1.msra.mxu0 0.0
  %239 = vmatprep.mubr.f32.mxu0 0.0
  %240 = vmatmul.mubr.f32.gmra.mrb[0].mxu0 %v76
  %v241 = vpop.f32.mrb[0].mxu0
  %v242 = vadd.f32 %v72, %v241
  %v243 = vpop.f32.mrb[0].mxu0
  %244 = vmatprep.mubr.f32.mxu0 0.0
  %245 = vmatmul.mubr.f32.gmra.mrb[0].mxu0 %v79
  %v246 = vpop.f32.mrb[0].mxu0
  %v247 = vadd.f32 %v72, %v246
  %v248 = vpop.f32.mrb[0].mxu0
  %249 = vmatprep.mubr.f32.mxu0 0.0
  %250 = vmatmul.mubr.f32.gmra.mrb[0].mxu0 %v82
  %v251 = vpop.f32.mrb[0].mxu0
  %v252 = vadd.f32 %v72, %v251
  %v253 = vpop.f32.mrb[0].mxu0
  %254 = vmatprep.mubr.f32.mxu0 0.0
  %255 = vmatmul.mubr.f32.gmra.mrb[0].mxu0 %v85
  %v256 = vpop.f32.mrb[0].mxu0
  %v257 = vadd.f32 %v72, %v256
  %v258 = vpop.f32.mrb[0].mxu0
  %259 = vmatprep.mubr.f32.mxu0 0.0
  %260 = vmatmul.mubr.f32.gmra.mrb[0].mxu0 %v88
  %v261 = vpop.f32.mrb[0].mxu0
  %v262 = vadd.f32 %v72, %v261
  %v263 = vpop.f32.mrb[0].mxu0
  %264 = vmatprep.mubr.f32.mxu0 0.0
  %265 = vmatmul.mubr.f32.gmra.mrb[0].mxu0 %v91
  %v266 = vpop.f32.mrb[0].mxu0
  %v267 = vadd.f32 %v72, %v266
  %v268 = vpop.f32.mrb[0].mxu0
  %269 = vmatprep.mubr.f32.mxu0 0.0
  %270 = vmatmul.mubr.f32.gmra.mrb[0].mxu0 %v94
  %v271 = vpop.f32.mrb[0].mxu0
  %v272 = vadd.f32 %v72, %v271
  %v273 = vpop.f32.mrb[0].mxu0
  %274 = vmatprep.mubr.f32.mxu0 0.0
  %275 = vmatmul.mubr.f32.gmra.mrb[0].mxu0 %v97
  %v276 = vpop.f32.mrb[0].mxu0
  %v277 = vadd.f32 %v72, %v276
  %v278 = vpop.f32.mrb[0].mxu0
  %279 = vmatprep.mubr.f32.mxu0 0.0
  %280 = vmatmul.mubr.f32.gmra.mrb[0].mxu0 %v100
  %v281 = vpop.f32.mrb[0].mxu0
  %v282 = vadd.f32 %v72, %v281
  %v283 = vpop.f32.mrb[0].mxu0
  %284 = vmatprep.mubr.f32.mxu0 0.0
  %285 = vmatmul.mubr.f32.gmra.mrb[0].mxu0 %v103
  %v286 = vpop.f32.mrb[0].mxu0
  %v287 = vadd.f32 %v72, %v286
  %v288 = vpop.f32.mrb[0].mxu0
  %289 = vmatprep.mubr.f32.mxu0 0.0
  %290 = vmatmul.mubr.f32.gmra.mrb[0].mxu0 %v106
  %v291 = vpop.f32.mrb[0].mxu0
  %v292 = vadd.f32 %v72, %v291
  %v293 = vpop.f32.mrb[0].mxu0
  %294 = vmatprep.mubr.f32.mxu0 0.0
  %295 = vmatmul.mubr.f32.gmra.mrb[0].mxu0 %v109
  %v296 = vpop.f32.mrb[0].mxu0
  %v297 = vadd.f32 %v72, %v296
  %v298 = vpop.f32.mrb[0].mxu0
  %299 = vmatprep.mubr.f32.mxu0 0.0
  %300 = vmatmul.mubr.f32.gmra.mrb[0].mxu0 %v112
  %v301 = vpop.f32.mrb[0].mxu0
  %v302 = vadd.f32 %v72, %v301
  %v303 = vpop.f32.mrb[0].mxu0
  %304 = vmatprep.mubr.f32.mxu0 0.0
  %305 = vmatmul.mubr.f32.gmra.mrb[0].mxu0 %v115
  %v306 = vpop.f32.mrb[0].mxu0
  %v307 = vadd.f32 %v72, %v306
  %v308 = vpop.f32.mrb[0].mxu0
  %309 = vmatprep.mubr.f32.mxu0 0.0
  %310 = vmatmul.mubr.f32.gmra.mrb[0].mxu0 %v118
  %v311 = vpop.f32.mrb[0].mxu0
  %v312 = vadd.f32 %v72, %v311
  %v313 = vpop.f32.mrb[0].mxu0
  %314 = vmatprep.mubr.f32.mxu0 0.0
  %315 = vmatmul.mubr.f32.gmra.mrb[0].mxu0 %v121
  %v316 = vpop.f32.mrb[0].mxu0
  %v317 = vadd.f32 %v72, %v316
  %v318 = vpop.f32.mrb[0].mxu0
  %319 = vmatprep.mubr.f32.mxu0 0.0
  %320 = vmatmul.mubr.f32.gmra.mrb[0].mxu0 %v124
  %v321 = vpop.f32.mrb[0].mxu0
  %v322 = vadd.f32 %v72, %v321
  %v323 = vpop.f32.mrb[0].mxu0
  %324 = vmatprep.mubr.f32.mxu0 0.0
  %325 = vmatmul.mubr.f32.gmra.mrb[0].mxu0 %v127
  %v326 = vpop.f32.mrb[0].mxu0
  %v327 = vadd.f32 %v72, %v326
  %v328 = vpop.f32.mrb[0].mxu0
  %329 = vmatprep.mubr.f32.mxu0 0.0
  %330 = vmatmul.mubr.f32.gmra.mrb[0].mxu0 %v130
  %v331 = vpop.f32.mrb[0].mxu0
  %v332 = vadd.f32 %v72, %v331
  %v333 = vpop.f32.mrb[0].mxu0
  %334 = vmatprep.mubr.f32.mxu0 0.0
  %335 = vmatmul.mubr.f32.gmra.mrb[0].mxu0 %v133
  %v336 = vpop.f32.mrb[0].mxu0
  %v337 = vadd.f32 %v72, %v336
  %v338 = vpop.f32.mrb[0].mxu0
  %339 = vmatprep.mubr.f32.mxu0 0.0
  %340 = vmatmul.mubr.f32.gmra.mrb[0].mxu0 %v136
  %v341 = vpop.f32.mrb[0].mxu0
  %v342 = vadd.f32 %v72, %v341
  %v343 = vpop.f32.mrb[0].mxu0
  %344 = vmatprep.mubr.f32.mxu0 0.0
  %345 = vmatmul.mubr.f32.gmra.mrb[0].mxu0 %v139
  %v346 = vpop.f32.mrb[0].mxu0
  %v347 = vadd.f32 %v72, %v346
  %v348 = vpop.f32.mrb[0].mxu0
  %349 = vmatprep.mubr.f32.mxu0 0.0
  %350 = vmatmul.mubr.f32.gmra.mrb[0].mxu0 %v142
  %v351 = vpop.f32.mrb[0].mxu0
  %v352 = vadd.f32 %v72, %v351
  %v353 = vpop.f32.mrb[0].mxu0
  %354 = vmatprep.mubr.f32.mxu0 0.0
  %355 = vmatmul.mubr.f32.gmra.mrb[0].mxu0 %v145
  %v356 = vpop.f32.mrb[0].mxu0
  %v357 = vadd.f32 %v72, %v356
  %v358 = vpop.f32.mrb[0].mxu0
  %359 = vmatprep.mubr.f32.mxu0 0.0
  %360 = vmatmul.mubr.f32.gmra.mrb[0].mxu0 %v148
  %v361 = vpop.f32.mrb[0].mxu0
  %v362 = vadd.f32 %v72, %v361
  %v363 = vpop.f32.mrb[0].mxu0
  %364 = vmatprep.mubr.f32.mxu0 0.0
  %365 = vmatmul.mubr.f32.gmra.mrb[0].mxu0 %v151
  %v366 = vpop.f32.mrb[0].mxu0
  %v367 = vadd.f32 %v72, %v366
  %v368 = vpop.f32.mrb[0].mxu0
  %369 = vmatprep.mubr.f32.mxu0 0.0
  %370 = vmatmul.mubr.f32.gmra.mrb[0].mxu0 %v154
  %v371 = vpop.f32.mrb[0].mxu0
  %v372 = vadd.f32 %v72, %v371
  %v373 = vpop.f32.mrb[0].mxu0
  %374 = vmatprep.mubr.f32.mxu0 0.0
  %375 = vmatmul.mubr.f32.gmra.mrb[0].mxu0 %v157
  %v376 = vpop.f32.mrb[0].mxu0
  %v377 = vadd.f32 %v72, %v376
  %v378 = vpop.f32.mrb[0].mxu0
  %379 = vmatprep.mubr.f32.mxu0 0.0
  %380 = vmatmul.mubr.f32.gmra.mrb[0].mxu0 %v160
  %v381 = vpop.f32.mrb[0].mxu0
  %v382 = vadd.f32 %v72, %v381
  %v383 = vpop.f32.mrb[0].mxu0
  %384 = vmatprep.mubr.f32.mxu0 0.0
  %385 = vmatmul.mubr.f32.gmra.mrb[0].mxu0 %v163
  %v386 = vpop.f32.mrb[0].mxu0
  %v387 = vadd.f32 %v72, %v386
  %v388 = vpop.f32.mrb[0].mxu0
  %389 = vmatprep.mubr.f32.mxu0 0.0
  %390 = vmatmul.mubr.f32.gmra.mrb[0].mxu0 %v166
  %v391 = vpop.f32.mrb[0].mxu0
  %v392 = vadd.f32 %v72, %v391
  %v393 = vpop.f32.mrb[0].mxu0
  %394 = vmatprep.mubr.f32.mxu0 0.0
  %395 = vmatmul.mubr.f32.gmra.mrb[0].mxu0 %v169
  %v396 = vpop.f32.mrb[0].mxu0
  %v397 = vadd.f32 %v72, %v396
  %v398 = vpop.f32.mrb[0].mxu0
  %399 = vdwg.mxu0
  %v400 = vmax.f32 %v242, 0.0
  %v401 = vmax.f32 %v247, 0.0
  %v402 = vmax.f32 %v252, 0.0
  %v403 = vmax.f32 %v257, 0.0
  %v404 = vmax.f32 %v262, 0.0
  %v405 = vmax.f32 %v267, 0.0
  %v406 = vmax.f32 %v272, 0.0
  %v407 = vmax.f32 %v277, 0.0
  %v408 = vmax.f32 %v282, 0.0
  %v409 = vmax.f32 %v287, 0.0
  %v410 = vmax.f32 %v292, 0.0
  %v411 = vmax.f32 %v297, 0.0
  %v412 = vmax.f32 %v302, 0.0
  %v413 = vmax.f32 %v307, 0.0
  %v414 = vmax.f32 %v312, 0.0
  %v415 = vmax.f32 %v317, 0.0
  %v416 = vmax.f32 %v322, 0.0
  %v417 = vmax.f32 %v327, 0.0
  %v418 = vmax.f32 %v332, 0.0
  %v419 = vmax.f32 %v337, 0.0
  %v420 = vmax.f32 %v342, 0.0
  %v421 = vmax.f32 %v347, 0.0
  %v422 = vmax.f32 %v352, 0.0
  %v423 = vmax.f32 %v357, 0.0
  %v424 = vmax.f32 %v362, 0.0
  %v425 = vmax.f32 %v367, 0.0
  %v426 = vmax.f32 %v372, 0.0
  %v427 = vmax.f32 %v377, 0.0
  %v428 = vmax.f32 %v382, 0.0
  %v429 = vmax.f32 %v387, 0.0
  %v430 = vmax.f32 %v392, 0.0
  %v431 = vmax.f32 %v397, 0.0
  %v432 = vpack.c.bf16 %v401, %v400
  %v433 = vpack.c.bf16 %v403, %v402
  %v434 = vpack.c.bf16 %v405, %v404
  %v435 = vpack.c.bf16 %v407, %v406
  %v436 = vpack.c.bf16 %v409, %v408
  %v437 = vpack.c.bf16 %v411, %v410
  %v438 = vpack.c.bf16 %v413, %v412
  %v439 = vpack.c.bf16 %v415, %v414
  %v440 = vpack.c.bf16 %v417, %v416
  %v441 = vpack.c.bf16 %v419, %v418
  %v442 = vpack.c.bf16 %v421, %v420
  %v443 = vpack.c.bf16 %v423, %v422
  %v444 = vpack.c.bf16 %v425, %v424
  %v445 = vpack.c.bf16 %v427, %v426
  %v446 = vpack.c.bf16 %v429, %v428
  %v447 = vpack.c.bf16 %v431, %v430
  %v448 = vld [vmem:[%s3] sm:$0xf]
  %v449 = vld [vmem:[%s3 + $0x4] sm:$0xf]
  %v450 = vld [vmem:[%s3 + $0x8] sm:$0xf]
  %v451 = vld [vmem:[%s3 + $0xc] sm:$0xf]
  %v452 = vld [vmem:[%s3 + $0x10] sm:$0xf]
  %v453 = vld [vmem:[%s3 + $0x14] sm:$0xf]
  %v454 = vld [vmem:[%s3 + $0x18] sm:$0xf]
  %v455 = vld [vmem:[%s3 + $0x1c] sm:$0xf]
  %v456 = vld [vmem:[%s4] sm:$0x1]
  %v458 = vlaneseq
  %v459 = vshrl.u32 %v458, 7
  %v460 = vsub.s32 0, %v459
  %v461 = vrot.slane %v456, %v460
  %v471 = vunpack.c.l.b16 %v448
  %v472 = vunpack.c.l.b16 %v449
  %v473 = vunpack.c.l.b16 %v450
  %v474 = vunpack.c.l.b16 %v451
  %v475 = vunpack.c.l.b16 %v452
  %v476 = vunpack.c.l.b16 %v453
  %v477 = vunpack.c.l.b16 %v454
  %v478 = vunpack.c.l.b16 %v455
  %v479 = vpack.c.b16 %v472, %v471
  %v480 = vpack.c.b16 %v474, %v473
  %v481 = vpack.c.b16 %v476, %v475
  %v482 = vpack.c.b16 %v478, %v477
  %vm487 = vcmask 523264
  %v489 = vsel %vm487, %v432, 0
  %v492 = vsel %vm487, %v433, 0
  %v495 = vsel %vm487, %v434, 0
  %v498 = vsel %vm487, %v435, 0
  %v501 = vsel %vm487, %v436, 0
  %v504 = vsel %vm487, %v437, 0
  %v507 = vsel %vm487, %v438, 0
  %v510 = vsel %vm487, %v439, 0
  %v513 = vsel %vm487, %v440, 0
  %v516 = vsel %vm487, %v441, 0
  %v519 = vsel %vm487, %v442, 0
  %v522 = vsel %vm487, %v443, 0
  %v525 = vsel %vm487, %v444, 0
  %v528 = vsel %vm487, %v445, 0
  %v531 = vsel %vm487, %v446, 0
  %v534 = vsel %vm487, %v447, 0
  %536 = vmatprep.subr.bf16.mxu0 0
  %537 = vmatpush1.bf16.msra.mxu0 %v479
  %538 = vmatprep.subr.bf16.mxu0 0
  %539 = vmatpush1.bf16.msra.mxu0 %v480
  %540 = vmatprep.subr.bf16.mxu0 0
  %541 = vmatpush1.bf16.msra.mxu0 %v481
  %542 = vmatprep.subr.bf16.mxu0 0
  %543 = vmatpush1.bf16.msra.mxu0 %v482
  %544 = vmatprep.subr.bf16.mxu0 0
  %545 = vmatpush1.bf16.msra.mxu0 0
  %546 = vmatprep.subr.bf16.mxu0 0
  %547 = vmatpush1.bf16.msra.mxu0 0
  %548 = vmatprep.subr.bf16.mxu0 0
  %549 = vmatpush1.bf16.msra.mxu0 0
  %550 = vmatprep.subr.bf16.mxu0 0
  %551 = vmatpush1.bf16.msra.mxu0 0
  %552 = vmatprep.subr.bf16.mxu0 0
  %553 = vmatpush1.bf16.msra.mxu0 0
  %554 = vmatprep.subr.bf16.mxu0 0
  %555 = vmatpush1.bf16.msra.mxu0 0
  %556 = vmatprep.subr.bf16.mxu0 0
  %557 = vmatpush1.bf16.msra.mxu0 0
  %558 = vmatprep.subr.bf16.mxu0 0
  %559 = vmatpush1.bf16.msra.mxu0 0
  %560 = vmatprep.subr.bf16.mxu0 0
  %561 = vmatpush1.bf16.msra.mxu0 0
  %562 = vmatprep.subr.bf16.mxu0 0
  %563 = vmatpush1.bf16.msra.mxu0 0
  %564 = vmatprep.subr.bf16.mxu0 0
  %565 = vmatpush1.bf16.msra.mxu0 0
  %566 = vmatprep.subr.bf16.mxu0 0
  %567 = vmatpush1.bf16.msra.mxu0 0
  %568 = vmatprep.mubr.bf16.mxu0 0
  %569 = vmatmul.mubr.bf16.gmra.mrb[0].mxu0 %v489
  %v570 = vpop.f32.mrb[0].mxu0
  %v571 = vadd.f32 %v461, %v570
  %v572 = vpop.f32.mrb[0].mxu0
  %v573 = vpop.f32.mrb[0].mxu0
  %v574 = vadd.f32 %v461, %v573
  %v575 = vpop.f32.mrb[0].mxu0
  %576 = vmatprep.mubr.bf16.mxu0 0
  %577 = vmatmul.mubr.bf16.gmra.mrb[0].mxu0 %v492
  %v578 = vpop.f32.mrb[0].mxu0
  %v579 = vadd.f32 %v461, %v578
  %v580 = vpop.f32.mrb[0].mxu0
  %v581 = vpop.f32.mrb[0].mxu0
  %v582 = vadd.f32 %v461, %v581
  %v583 = vpop.f32.mrb[0].mxu0
  %584 = vmatprep.mubr.bf16.mxu0 0
  %585 = vmatmul.mubr.bf16.gmra.mrb[0].mxu0 %v495
  %v586 = vpop.f32.mrb[0].mxu0
  %v587 = vadd.f32 %v461, %v586
  %v588 = vpop.f32.mrb[0].mxu0
  %v589 = vpop.f32.mrb[0].mxu0
  %v590 = vadd.f32 %v461, %v589
  %v591 = vpop.f32.mrb[0].mxu0
  %592 = vmatprep.mubr.bf16.mxu0 0
  %593 = vmatmul.mubr.bf16.gmra.mrb[0].mxu0 %v498
  %v594 = vpop.f32.mrb[0].mxu0
  %v595 = vadd.f32 %v461, %v594
  %v596 = vpop.f32.mrb[0].mxu0
  %v597 = vpop.f32.mrb[0].mxu0
  %v598 = vadd.f32 %v461, %v597
  %v599 = vpop.f32.mrb[0].mxu0
  %600 = vmatprep.mubr.bf16.mxu0 0
  %601 = vmatmul.mubr.bf16.gmra.mrb[0].mxu0 %v501
  %v602 = vpop.f32.mrb[0].mxu0
  %v603 = vadd.f32 %v461, %v602
  %v604 = vpop.f32.mrb[0].mxu0
  %v605 = vpop.f32.mrb[0].mxu0
  %v606 = vadd.f32 %v461, %v605
  %v607 = vpop.f32.mrb[0].mxu0
  %608 = vmatprep.mubr.bf16.mxu0 0
  %609 = vmatmul.mubr.bf16.gmra.mrb[0].mxu0 %v504
  %v610 = vpop.f32.mrb[0].mxu0
  %v611 = vadd.f32 %v461, %v610
  %v612 = vpop.f32.mrb[0].mxu0
  %v613 = vpop.f32.mrb[0].mxu0
  %v614 = vadd.f32 %v461, %v613
  %v615 = vpop.f32.mrb[0].mxu0
  %616 = vmatprep.mubr.bf16.mxu0 0
  %617 = vmatmul.mubr.bf16.gmra.mrb[0].mxu0 %v507
  %v618 = vpop.f32.mrb[0].mxu0
  %v619 = vadd.f32 %v461, %v618
  %v620 = vpop.f32.mrb[0].mxu0
  %v621 = vpop.f32.mrb[0].mxu0
  %v622 = vadd.f32 %v461, %v621
  %v623 = vpop.f32.mrb[0].mxu0
  %624 = vmatprep.mubr.bf16.mxu0 0
  %625 = vmatmul.mubr.bf16.gmra.mrb[0].mxu0 %v510
  %v626 = vpop.f32.mrb[0].mxu0
  %v627 = vadd.f32 %v461, %v626
  %v628 = vpop.f32.mrb[0].mxu0
  %v629 = vpop.f32.mrb[0].mxu0
  %v630 = vadd.f32 %v461, %v629
  %v631 = vpop.f32.mrb[0].mxu0
  %632 = vmatprep.mubr.bf16.mxu0 0
  %633 = vmatmul.mubr.bf16.gmra.mrb[0].mxu0 %v513
  %v634 = vpop.f32.mrb[0].mxu0
  %v635 = vadd.f32 %v461, %v634
  %v636 = vpop.f32.mrb[0].mxu0
  %v637 = vpop.f32.mrb[0].mxu0
  %v638 = vadd.f32 %v461, %v637
  %v639 = vpop.f32.mrb[0].mxu0
  %640 = vmatprep.mubr.bf16.mxu0 0
  %641 = vmatmul.mubr.bf16.gmra.mrb[0].mxu0 %v516
  %v642 = vpop.f32.mrb[0].mxu0
  %v643 = vadd.f32 %v461, %v642
  %v644 = vpop.f32.mrb[0].mxu0
  %v645 = vpop.f32.mrb[0].mxu0
  %v646 = vadd.f32 %v461, %v645
  %v647 = vpop.f32.mrb[0].mxu0
  %648 = vmatprep.mubr.bf16.mxu0 0
  %649 = vmatmul.mubr.bf16.gmra.mrb[0].mxu0 %v519
  %v650 = vpop.f32.mrb[0].mxu0
  %v651 = vadd.f32 %v461, %v650
  %v652 = vpop.f32.mrb[0].mxu0
  %v653 = vpop.f32.mrb[0].mxu0
  %v654 = vadd.f32 %v461, %v653
  %v655 = vpop.f32.mrb[0].mxu0
  %656 = vmatprep.mubr.bf16.mxu0 0
  %657 = vmatmul.mubr.bf16.gmra.mrb[0].mxu0 %v522
  %v658 = vpop.f32.mrb[0].mxu0
  %v659 = vadd.f32 %v461, %v658
  %v660 = vpop.f32.mrb[0].mxu0
  %v661 = vpop.f32.mrb[0].mxu0
  %v662 = vadd.f32 %v461, %v661
  %v663 = vpop.f32.mrb[0].mxu0
  %664 = vmatprep.mubr.bf16.mxu0 0
  %665 = vmatmul.mubr.bf16.gmra.mrb[0].mxu0 %v525
  %v666 = vpop.f32.mrb[0].mxu0
  %v667 = vadd.f32 %v461, %v666
  %v668 = vpop.f32.mrb[0].mxu0
  %v669 = vpop.f32.mrb[0].mxu0
  %v670 = vadd.f32 %v461, %v669
  %v671 = vpop.f32.mrb[0].mxu0
  %672 = vmatprep.mubr.bf16.mxu0 0
  %673 = vmatmul.mubr.bf16.gmra.mrb[0].mxu0 %v528
  %v674 = vpop.f32.mrb[0].mxu0
  %v675 = vadd.f32 %v461, %v674
  %v676 = vpop.f32.mrb[0].mxu0
  %v677 = vpop.f32.mrb[0].mxu0
  %v678 = vadd.f32 %v461, %v677
  %v679 = vpop.f32.mrb[0].mxu0
  %680 = vmatprep.mubr.bf16.mxu0 0
  %681 = vmatmul.mubr.bf16.gmra.mrb[0].mxu0 %v531
  %v682 = vpop.f32.mrb[0].mxu0
  %v683 = vadd.f32 %v461, %v682
  %v684 = vpop.f32.mrb[0].mxu0
  %v685 = vpop.f32.mrb[0].mxu0
  %v686 = vadd.f32 %v461, %v685
  %v687 = vpop.f32.mrb[0].mxu0
  %688 = vmatprep.mubr.bf16.mxu0 0
  %689 = vmatmul.mubr.bf16.gmra.mrb[0].mxu0 %v534
  %v690 = vpop.f32.mrb[0].mxu0
  %v691 = vadd.f32 %v461, %v690
  %v692 = vpop.f32.mrb[0].mxu0
  %v693 = vpop.f32.mrb[0].mxu0
  %v694 = vadd.f32 %v461, %v693
  %v695 = vpop.f32.mrb[0].mxu0
  %696 = vdwg.mxu0
  %v697 = vmax.f32 %v571, 0.0
  %v698 = vmax.f32 %v574, 0.0
  %v699 = vmax.f32 %v579, 0.0
  %v700 = vmax.f32 %v582, 0.0
  %v701 = vmax.f32 %v587, 0.0
  %v702 = vmax.f32 %v590, 0.0
  %v703 = vmax.f32 %v595, 0.0
  %v704 = vmax.f32 %v598, 0.0
  %v705 = vmax.f32 %v603, 0.0
  %v706 = vmax.f32 %v606, 0.0
  %v707 = vmax.f32 %v611, 0.0
  %v708 = vmax.f32 %v614, 0.0
  %v709 = vmax.f32 %v619, 0.0
  %v710 = vmax.f32 %v622, 0.0
  %v711 = vmax.f32 %v627, 0.0
  %v712 = vmax.f32 %v630, 0.0
  %v713 = vmax.f32 %v635, 0.0
  %v714 = vmax.f32 %v638, 0.0
  %v715 = vmax.f32 %v643, 0.0
  %v716 = vmax.f32 %v646, 0.0
  %v717 = vmax.f32 %v651, 0.0
  %v718 = vmax.f32 %v654, 0.0
  %v719 = vmax.f32 %v659, 0.0
  %v720 = vmax.f32 %v662, 0.0
  %v721 = vmax.f32 %v667, 0.0
  %v722 = vmax.f32 %v670, 0.0
  %v723 = vmax.f32 %v675, 0.0
  %v724 = vmax.f32 %v678, 0.0
  %v725 = vmax.f32 %v683, 0.0
  %v726 = vmax.f32 %v686, 0.0
  %v727 = vmax.f32 %v691, 0.0
  %v728 = vmax.f32 %v694, 0.0
  %v729 = vpack.c.bf16 %v698, %v697
  %v730 = vpack.c.bf16 %v700, %v699
  %v731 = vpack.c.bf16 %v702, %v701
  %v732 = vpack.c.bf16 %v704, %v703
  %v733 = vpack.c.bf16 %v706, %v705
  %v734 = vpack.c.bf16 %v708, %v707
  %v735 = vpack.c.bf16 %v710, %v709
  %v736 = vpack.c.bf16 %v712, %v711
  %v737 = vpack.c.bf16 %v714, %v713
  %v738 = vpack.c.bf16 %v716, %v715
  %v739 = vpack.c.bf16 %v718, %v717
  %v740 = vpack.c.bf16 %v720, %v719
  %v741 = vpack.c.bf16 %v722, %v721
  %v742 = vpack.c.bf16 %v724, %v723
  %v743 = vpack.c.bf16 %v726, %v725
  %v744 = vpack.c.bf16 %v728, %v727
  %v745 = vld [vmem:[%s5] sm:$0xff]
  %v746 = vld [vmem:[%s5 + $0x8] sm:$0xff]
  %v747 = vld [vmem:[%s5 + $0x10] sm:$0xff]
  %v748 = vld [vmem:[%s5 + $0x18] sm:$0xff]
  %v749 = vld [vmem:[%s5 + $0x20] sm:$0xff]
  %v750 = vld [vmem:[%s5 + $0x28] sm:$0xff]
  %v751 = vld [vmem:[%s5 + $0x30] sm:$0xff]
  %v752 = vld [vmem:[%s5 + $0x38] sm:$0xff]
  %v753 = vld [vmem:[%s5 + $0x40] sm:$0xff]
  %v754 = vld [vmem:[%s5 + $0x48] sm:$0xff]
  %v755 = vld [vmem:[%s5 + $0x50] sm:$0xff]
  %v756 = vld [vmem:[%s5 + $0x58] sm:$0xff]
  %v757 = vld [vmem:[%s5 + $0x60] sm:$0xff]
  %v758 = vld [vmem:[%s5 + $0x68] sm:$0xff]
  %v759 = vld [vmem:[%s5 + $0x70] sm:$0xff]
  %v760 = vld [vmem:[%s5 + $0x78] sm:$0xff]
  %v761 = vld [vmem:[%s6] sm:$0x3]
  %v763 = vlaneseq
  %v764 = vshrl.u32 %v763, 7
  %v765 = vsub.s32 0, %v764
  %v766 = vrot.slane %v761, %v765
  %v767 = vlaneseq
  %v768 = vshrl.u32 %v767, 7
  %v769 = vsub.s32 1, %v768
  %v770 = vrot.slane %v761, %v769
  %v789 = vunpack.c.l.b16 %v745
  %v790 = vunpack.c.h.b16 %v745
  %v791 = vunpack.c.l.b16 %v746
  %v792 = vunpack.c.h.b16 %v746
  %v793 = vunpack.c.l.b16 %v747
  %v794 = vunpack.c.h.b16 %v747
  %v795 = vunpack.c.l.b16 %v748
  %v796 = vunpack.c.h.b16 %v748
  %v797 = vunpack.c.l.b16 %v749
  %v798 = vunpack.c.h.b16 %v749
  %v799 = vunpack.c.l.b16 %v750
  %v800 = vunpack.c.h.b16 %v750
  %v801 = vunpack.c.l.b16 %v751
  %v802 = vunpack.c.h.b16 %v751
  %v803 = vunpack.c.l.b16 %v752
  %v804 = vunpack.c.h.b16 %v752
  %v805 = vunpack.c.l.b16 %v753
  %v806 = vunpack.c.h.b16 %v753
  %v807 = vunpack.c.l.b16 %v754
  %v808 = vunpack.c.h.b16 %v754
  %v809 = vunpack.c.l.b16 %v755
  %v810 = vunpack.c.h.b16 %v755
  %v811 = vunpack.c.l.b16 %v756
  %v812 = vunpack.c.h.b16 %v756
  %v813 = vunpack.c.l.b16 %v757
  %v814 = vunpack.c.h.b16 %v757
  %v815 = vunpack.c.l.b16 %v758
  %v816 = vunpack.c.h.b16 %v758
  %v817 = vunpack.c.l.b16 %v759
  %v818 = vunpack.c.h.b16 %v759
  %v819 = vunpack.c.l.b16 %v760
  %v820 = vunpack.c.h.b16 %v760
  %v821 = vpack.c.b16 %v791, %v789
  %v822 = vpack.c.b16 %v792, %v790
  %v823 = vpack.c.b16 %v795, %v793
  %v824 = vpack.c.b16 %v796, %v794
  %v825 = vpack.c.b16 %v799, %v797
  %v826 = vpack.c.b16 %v800, %v798
  %v827 = vpack.c.b16 %v803, %v801
  %v828 = vpack.c.b16 %v804, %v802
  %v829 = vpack.c.b16 %v807, %v805
  %v830 = vpack.c.b16 %v808, %v806
  %v831 = vpack.c.b16 %v811, %v809
  %v832 = vpack.c.b16 %v812, %v810
  %v833 = vpack.c.b16 %v815, %v813
  %v834 = vpack.c.b16 %v816, %v814
  %v835 = vpack.c.b16 %v819, %v817
  %v836 = vpack.c.b16 %v820, %v818
  %853 = vmatprep.subr.bf16.mxu0 %v822
  %854 = vmatpush1.bf16.msra.mxu0 %v821
  %855 = vmatprep.subr.bf16.mxu0 %v824
  %856 = vmatpush1.bf16.msra.mxu0 %v823
  %857 = vmatprep.subr.bf16.mxu0 %v826
  %858 = vmatpush1.bf16.msra.mxu0 %v825
  %859 = vmatprep.subr.bf16.mxu0 %v828
  %860 = vmatpush1.bf16.msra.mxu0 %v827
  %861 = vmatprep.subr.bf16.mxu0 %v830
  %862 = vmatpush1.bf16.msra.mxu0 %v829
  %863 = vmatprep.subr.bf16.mxu0 %v832
  %864 = vmatpush1.bf16.msra.mxu0 %v831
  %865 = vmatprep.subr.bf16.mxu0 %v834
  %866 = vmatpush1.bf16.msra.mxu0 %v833
  %867 = vmatprep.subr.bf16.mxu0 %v836
  %868 = vmatpush1.bf16.msra.mxu0 %v835
  %869 = vmatprep.subr.bf16.mxu0 0
  %870 = vmatpush1.bf16.msra.mxu0 0
  %871 = vmatprep.subr.bf16.mxu0 0
  %872 = vmatpush1.bf16.msra.mxu0 0
  %873 = vmatprep.subr.bf16.mxu0 0
  %874 = vmatpush1.bf16.msra.mxu0 0
  %875 = vmatprep.subr.bf16.mxu0 0
  %876 = vmatpush1.bf16.msra.mxu0 0
  %877 = vmatprep.subr.bf16.mxu0 0
  %878 = vmatpush1.bf16.msra.mxu0 0
  %879 = vmatprep.subr.bf16.mxu0 0
  %880 = vmatpush1.bf16.msra.mxu0 0
  %881 = vmatprep.subr.bf16.mxu0 0
  %882 = vmatpush1.bf16.msra.mxu0 0
  %883 = vmatprep.subr.bf16.mxu0 0
  %884 = vmatpush1.bf16.msra.mxu0 0
  %885 = vmatprep.mubr.bf16.mxu0 0
  %886 = vmatmul.mubr.bf16.gmra.mrb[0].mxu0 %v729
  %v887 = vpop.f32.mrb[0].mxu0
  %v888 = vadd.f32 %v766, %v887
  %v889 = vpop.f32.mrb[0].mxu0
  %v890 = vadd.f32 %v770, %v889
  %v891 = vpop.f32.mrb[0].mxu0
  %v892 = vadd.f32 %v766, %v891
  %v893 = vpop.f32.mrb[0].mxu0
  %v894 = vadd.f32 %v770, %v893
  %895 = vmatprep.mubr.bf16.mxu0 0
  %896 = vmatmul.mubr.bf16.gmra.mrb[0].mxu0 %v730
  %v897 = vpop.f32.mrb[0].mxu0
  %v898 = vadd.f32 %v766, %v897
  %v899 = vpop.f32.mrb[0].mxu0
  %v900 = vadd.f32 %v770, %v899
  %v901 = vpop.f32.mrb[0].mxu0
  %v902 = vadd.f32 %v766, %v901
  %v903 = vpop.f32.mrb[0].mxu0
  %v904 = vadd.f32 %v770, %v903
  %905 = vmatprep.mubr.bf16.mxu0 0
  %906 = vmatmul.mubr.bf16.gmra.mrb[0].mxu0 %v731
  %v907 = vpop.f32.mrb[0].mxu0
  %v908 = vadd.f32 %v766, %v907
  %v909 = vpop.f32.mrb[0].mxu0
  %v910 = vadd.f32 %v770, %v909
  %v911 = vpop.f32.mrb[0].mxu0
  %v912 = vadd.f32 %v766, %v911
  %v913 = vpop.f32.mrb[0].mxu0
  %v914 = vadd.f32 %v770, %v913
  %915 = vmatprep.mubr.bf16.mxu0 0
  %916 = vmatmul.mubr.bf16.gmra.mrb[0].mxu0 %v732
  %v917 = vpop.f32.mrb[0].mxu0
  %v918 = vadd.f32 %v766, %v917
  %v919 = vpop.f32.mrb[0].mxu0
  %v920 = vadd.f32 %v770, %v919
  %v921 = vpop.f32.mrb[0].mxu0
  %v922 = vadd.f32 %v766, %v921
  %v923 = vpop.f32.mrb[0].mxu0
  %v924 = vadd.f32 %v770, %v923
  %925 = vmatprep.mubr.bf16.mxu0 0
  %926 = vmatmul.mubr.bf16.gmra.mrb[0].mxu0 %v733
  %v927 = vpop.f32.mrb[0].mxu0
  %v928 = vadd.f32 %v766, %v927
  %v929 = vpop.f32.mrb[0].mxu0
  %v930 = vadd.f32 %v770, %v929
  %v931 = vpop.f32.mrb[0].mxu0
  %v932 = vadd.f32 %v766, %v931
  %v933 = vpop.f32.mrb[0].mxu0
  %v934 = vadd.f32 %v770, %v933
  %935 = vmatprep.mubr.bf16.mxu0 0
  %936 = vmatmul.mubr.bf16.gmra.mrb[0].mxu0 %v734
  %v937 = vpop.f32.mrb[0].mxu0
  %v938 = vadd.f32 %v766, %v937
  %v939 = vpop.f32.mrb[0].mxu0
  %v940 = vadd.f32 %v770, %v939
  %v941 = vpop.f32.mrb[0].mxu0
  %v942 = vadd.f32 %v766, %v941
  %v943 = vpop.f32.mrb[0].mxu0
  %v944 = vadd.f32 %v770, %v943
  %945 = vmatprep.mubr.bf16.mxu0 0
  %946 = vmatmul.mubr.bf16.gmra.mrb[0].mxu0 %v735
  %v947 = vpop.f32.mrb[0].mxu0
  %v948 = vadd.f32 %v766, %v947
  %v949 = vpop.f32.mrb[0].mxu0
  %v950 = vadd.f32 %v770, %v949
  %v951 = vpop.f32.mrb[0].mxu0
  %v952 = vadd.f32 %v766, %v951
  %v953 = vpop.f32.mrb[0].mxu0
  %v954 = vadd.f32 %v770, %v953
  %955 = vmatprep.mubr.bf16.mxu0 0
  %956 = vmatmul.mubr.bf16.gmra.mrb[0].mxu0 %v736
  %v957 = vpop.f32.mrb[0].mxu0
  %v958 = vadd.f32 %v766, %v957
  %v959 = vpop.f32.mrb[0].mxu0
  %v960 = vadd.f32 %v770, %v959
  %v961 = vpop.f32.mrb[0].mxu0
  %v962 = vadd.f32 %v766, %v961
  %v963 = vpop.f32.mrb[0].mxu0
  %v964 = vadd.f32 %v770, %v963
  %965 = vmatprep.mubr.bf16.mxu0 0
  %966 = vmatmul.mubr.bf16.gmra.mrb[0].mxu0 %v737
  %v967 = vpop.f32.mrb[0].mxu0
  %v968 = vadd.f32 %v766, %v967
  %v969 = vpop.f32.mrb[0].mxu0
  %v970 = vadd.f32 %v770, %v969
  %v971 = vpop.f32.mrb[0].mxu0
  %v972 = vadd.f32 %v766, %v971
  %v973 = vpop.f32.mrb[0].mxu0
  %v974 = vadd.f32 %v770, %v973
  %975 = vmatprep.mubr.bf16.mxu0 0
  %976 = vmatmul.mubr.bf16.gmra.mrb[0].mxu0 %v738
  %v977 = vpop.f32.mrb[0].mxu0
  %v978 = vadd.f32 %v766, %v977
  %v979 = vpop.f32.mrb[0].mxu0
  %v980 = vadd.f32 %v770, %v979
  %v981 = vpop.f32.mrb[0].mxu0
  %v982 = vadd.f32 %v766, %v981
  %v983 = vpop.f32.mrb[0].mxu0
  %v984 = vadd.f32 %v770, %v983
  %985 = vmatprep.mubr.bf16.mxu0 0
  %986 = vmatmul.mubr.bf16.gmra.mrb[0].mxu0 %v739
  %v987 = vpop.f32.mrb[0].mxu0
  %v988 = vadd.f32 %v766, %v987
  %v989 = vpop.f32.mrb[0].mxu0
  %v990 = vadd.f32 %v770, %v989
  %v991 = vpop.f32.mrb[0].mxu0
  %v992 = vadd.f32 %v766, %v991
  %v993 = vpop.f32.mrb[0].mxu0
  %v994 = vadd.f32 %v770, %v993
  %995 = vmatprep.mubr.bf16.mxu0 0
  %996 = vmatmul.mubr.bf16.gmra.mrb[0].mxu0 %v740
  %v997 = vpop.f32.mrb[0].mxu0
  %v998 = vadd.f32 %v766, %v997
  %v999 = vpop.f32.mrb[0].mxu0
  %v1000 = vadd.f32 %v770, %v999
  %v1001 = vpop.f32.mrb[0].mxu0
  %v1002 = vadd.f32 %v766, %v1001
  %v1003 = vpop.f32.mrb[0].mxu0
  %v1004 = vadd.f32 %v770, %v1003
  %1005 = vmatprep.mubr.bf16.mxu0 0
  %1006 = vmatmul.mubr.bf16.gmra.mrb[0].mxu0 %v741
  %v1007 = vpop.f32.mrb[0].mxu0
  %v1008 = vadd.f32 %v766, %v1007
  %v1009 = vpop.f32.mrb[0].mxu0
  %v1010 = vadd.f32 %v770, %v1009
  %v1011 = vpop.f32.mrb[0].mxu0
  %v1012 = vadd.f32 %v766, %v1011
  %v1013 = vpop.f32.mrb[0].mxu0
  %v1014 = vadd.f32 %v770, %v1013
  %1015 = vmatprep.mubr.bf16.mxu0 0
  %1016 = vmatmul.mubr.bf16.gmra.mrb[0].mxu0 %v742
  %v1017 = vpop.f32.mrb[0].mxu0
  %v1018 = vadd.f32 %v766, %v1017
  %v1019 = vpop.f32.mrb[0].mxu0
  %v1020 = vadd.f32 %v770, %v1019
  %v1021 = vpop.f32.mrb[0].mxu0
  %v1022 = vadd.f32 %v766, %v1021
  %v1023 = vpop.f32.mrb[0].mxu0
  %v1024 = vadd.f32 %v770, %v1023
  %1025 = vmatprep.mubr.bf16.mxu0 0
  %1026 = vmatmul.mubr.bf16.gmra.mrb[0].mxu0 %v743
  %v1027 = vpop.f32.mrb[0].mxu0
  %v1028 = vadd.f32 %v766, %v1027
  %v1029 = vpop.f32.mrb[0].mxu0
  %v1030 = vadd.f32 %v770, %v1029
  %v1031 = vpop.f32.mrb[0].mxu0
  %v1032 = vadd.f32 %v766, %v1031
  %v1033 = vpop.f32.mrb[0].mxu0
  %v1034 = vadd.f32 %v770, %v1033
  %1035 = vmatprep.mubr.bf16.mxu0 0
  %1036 = vmatmul.mubr.bf16.gmra.mrb[0].mxu0 %v744
  %v1037 = vpop.f32.mrb[0].mxu0
  %v1038 = vadd.f32 %v766, %v1037
  %v1039 = vpop.f32.mrb[0].mxu0
  %v1040 = vadd.f32 %v770, %v1039
  %v1041 = vpop.f32.mrb[0].mxu0
  %v1042 = vadd.f32 %v766, %v1041
  %v1043 = vpop.f32.mrb[0].mxu0
  %v1044 = vadd.f32 %v770, %v1043
  %1045 = vdwg.mxu0
  %v1046 = vmax.f32 %v888, 0.0
  %v1047 = vmax.f32 %v890, 0.0
  %v1048 = vmax.f32 %v892, 0.0
  %v1049 = vmax.f32 %v894, 0.0
  %v1050 = vmax.f32 %v898, 0.0
  %v1051 = vmax.f32 %v900, 0.0
  %v1052 = vmax.f32 %v902, 0.0
  %v1053 = vmax.f32 %v904, 0.0
  %v1054 = vmax.f32 %v908, 0.0
  %v1055 = vmax.f32 %v910, 0.0
  %v1056 = vmax.f32 %v912, 0.0
  %v1057 = vmax.f32 %v914, 0.0
  %v1058 = vmax.f32 %v918, 0.0
  %v1059 = vmax.f32 %v920, 0.0
  %v1060 = vmax.f32 %v922, 0.0
  %v1061 = vmax.f32 %v924, 0.0
  %v1062 = vmax.f32 %v928, 0.0
  %v1063 = vmax.f32 %v930, 0.0
  %v1064 = vmax.f32 %v932, 0.0
  %v1065 = vmax.f32 %v934, 0.0
  %v1066 = vmax.f32 %v938, 0.0
  %v1067 = vmax.f32 %v940, 0.0
  %v1068 = vmax.f32 %v942, 0.0
  %v1069 = vmax.f32 %v944, 0.0
  %v1070 = vmax.f32 %v948, 0.0
  %v1071 = vmax.f32 %v950, 0.0
  %v1072 = vmax.f32 %v952, 0.0
  %v1073 = vmax.f32 %v954, 0.0
  %v1074 = vmax.f32 %v958, 0.0
  %v1075 = vmax.f32 %v960, 0.0
  %v1076 = vmax.f32 %v962, 0.0
  %v1077 = vmax.f32 %v964, 0.0
  %v1078 = vmax.f32 %v968, 0.0
  %v1079 = vmax.f32 %v970, 0.0
  %v1080 = vmax.f32 %v972, 0.0
  %v1081 = vmax.f32 %v974, 0.0
  %v1082 = vmax.f32 %v978, 0.0
  %v1083 = vmax.f32 %v980, 0.0
  %v1084 = vmax.f32 %v982, 0.0
  %v1085 = vmax.f32 %v984, 0.0
  %v1086 = vmax.f32 %v988, 0.0
  %v1087 = vmax.f32 %v990, 0.0
  %v1088 = vmax.f32 %v992, 0.0
  %v1089 = vmax.f32 %v994, 0.0
  %v1090 = vmax.f32 %v998, 0.0
  %v1091 = vmax.f32 %v1000, 0.0
  %v1092 = vmax.f32 %v1002, 0.0
  %v1093 = vmax.f32 %v1004, 0.0
  %v1094 = vmax.f32 %v1008, 0.0
  %v1095 = vmax.f32 %v1010, 0.0
  %v1096 = vmax.f32 %v1012, 0.0
  %v1097 = vmax.f32 %v1014, 0.0
  %v1098 = vmax.f32 %v1018, 0.0
  %v1099 = vmax.f32 %v1020, 0.0
  %v1100 = vmax.f32 %v1022, 0.0
  %v1101 = vmax.f32 %v1024, 0.0
  %v1102 = vmax.f32 %v1028, 0.0
  %v1103 = vmax.f32 %v1030, 0.0
  %v1104 = vmax.f32 %v1032, 0.0
  %v1105 = vmax.f32 %v1034, 0.0
  %v1106 = vmax.f32 %v1038, 0.0
  %v1107 = vmax.f32 %v1040, 0.0
  %v1108 = vmax.f32 %v1042, 0.0
  %v1109 = vmax.f32 %v1044, 0.0
  %v1110 = vpack.c.bf16 %v1048, %v1046
  %v1111 = vpack.c.bf16 %v1049, %v1047
  %v1112 = vpack.c.bf16 %v1052, %v1050
  %v1113 = vpack.c.bf16 %v1053, %v1051
  %v1114 = vpack.c.bf16 %v1056, %v1054
  %v1115 = vpack.c.bf16 %v1057, %v1055
  %v1116 = vpack.c.bf16 %v1060, %v1058
  %v1117 = vpack.c.bf16 %v1061, %v1059
  %v1118 = vpack.c.bf16 %v1064, %v1062
  %v1119 = vpack.c.bf16 %v1065, %v1063
  %v1120 = vpack.c.bf16 %v1068, %v1066
  %v1121 = vpack.c.bf16 %v1069, %v1067
  %v1122 = vpack.c.bf16 %v1072, %v1070
  %v1123 = vpack.c.bf16 %v1073, %v1071
  %v1124 = vpack.c.bf16 %v1076, %v1074
  %v1125 = vpack.c.bf16 %v1077, %v1075
  %v1126 = vpack.c.bf16 %v1080, %v1078
  %v1127 = vpack.c.bf16 %v1081, %v1079
  %v1128 = vpack.c.bf16 %v1084, %v1082
  %v1129 = vpack.c.bf16 %v1085, %v1083
  %v1130 = vpack.c.bf16 %v1088, %v1086
  %v1131 = vpack.c.bf16 %v1089, %v1087
  %v1132 = vpack.c.bf16 %v1092, %v1090
  %v1133 = vpack.c.bf16 %v1093, %v1091
  %v1134 = vpack.c.bf16 %v1096, %v1094
  %v1135 = vpack.c.bf16 %v1097, %v1095
  %v1136 = vpack.c.bf16 %v1100, %v1098
  %v1137 = vpack.c.bf16 %v1101, %v1099
  %v1138 = vpack.c.bf16 %v1104, %v1102
  %v1139 = vpack.c.bf16 %v1105, %v1103
  %v1140 = vpack.c.bf16 %v1108, %v1106
  %v1141 = vpack.c.bf16 %v1109, %v1107
  %v1142 = vld [vmem:[%s7] sm:$0xf]
  %v1143 = vld [vmem:[%s7 + $0x4] sm:$0xf]
  %v1144 = vld [vmem:[%s7 + $0x8] sm:$0xf]
  %v1145 = vld [vmem:[%s7 + $0xc] sm:$0xf]
  %v1146 = vld [vmem:[%s7 + $0x10] sm:$0xf]
  %v1147 = vld [vmem:[%s7 + $0x14] sm:$0xf]
  %v1148 = vld [vmem:[%s7 + $0x18] sm:$0xf]
  %v1149 = vld [vmem:[%s7 + $0x1c] sm:$0xf]
  %v1150 = vld [vmem:[%s7 + $0x20] sm:$0xf]
  %v1151 = vld [vmem:[%s7 + $0x24] sm:$0xf]
  %v1152 = vld [vmem:[%s7 + $0x28] sm:$0xf]
  %v1153 = vld [vmem:[%s7 + $0x2c] sm:$0xf]
  %v1154 = vld [vmem:[%s7 + $0x30] sm:$0xf]
  %v1155 = vld [vmem:[%s7 + $0x34] sm:$0xf]
  %v1156 = vld [vmem:[%s7 + $0x38] sm:$0xf]
  %v1157 = vld [vmem:[%s7 + $0x3c] sm:$0xf]
  %v1158 = vld [vmem:[%s7 + $0x40] sm:$0xf]
  %v1159 = vld [vmem:[%s7 + $0x44] sm:$0xf]
  %v1160 = vld [vmem:[%s7 + $0x48] sm:$0xf]
  %v1161 = vld [vmem:[%s7 + $0x4c] sm:$0xf]
  %v1162 = vld [vmem:[%s7 + $0x50] sm:$0xf]
  %v1163 = vld [vmem:[%s7 + $0x54] sm:$0xf]
  %v1164 = vld [vmem:[%s7 + $0x58] sm:$0xf]
  %v1165 = vld [vmem:[%s7 + $0x5c] sm:$0xf]
  %v1166 = vld [vmem:[%s7 + $0x60] sm:$0xf]
  %v1167 = vld [vmem:[%s7 + $0x64] sm:$0xf]
  %v1168 = vld [vmem:[%s7 + $0x68] sm:$0xf]
  %v1169 = vld [vmem:[%s7 + $0x6c] sm:$0xf]
  %v1170 = vld [vmem:[%s7 + $0x70] sm:$0xf]
  %v1171 = vld [vmem:[%s7 + $0x74] sm:$0xf]
  %v1172 = vld [vmem:[%s7 + $0x78] sm:$0xf]
  %v1173 = vld [vmem:[%s7 + $0x7c] sm:$0xf]
  %v1174 = vld [vmem:[%s8] sm:$0x1]
  %v1176 = vlaneseq
  %v1177 = vshrl.u32 %v1176, 7
  %v1178 = vsub.s32 0, %v1177
  %v1179 = vrot.slane %v1174, %v1178
  %v1213 = vunpack.c.l.b16 %v1142
  %v1214 = vunpack.c.l.b16 %v1143
  %v1215 = vunpack.c.l.b16 %v1144
  %v1216 = vunpack.c.l.b16 %v1145
  %v1217 = vunpack.c.l.b16 %v1146
  %v1218 = vunpack.c.l.b16 %v1147
  %v1219 = vunpack.c.l.b16 %v1148
  %v1220 = vunpack.c.l.b16 %v1149
  %v1221 = vunpack.c.l.b16 %v1150
  %v1222 = vunpack.c.l.b16 %v1151
  %v1223 = vunpack.c.l.b16 %v1152
  %v1224 = vunpack.c.l.b16 %v1153
  %v1225 = vunpack.c.l.b16 %v1154
  %v1226 = vunpack.c.l.b16 %v1155
  %v1227 = vunpack.c.l.b16 %v1156
  %v1228 = vunpack.c.l.b16 %v1157
  %v1229 = vunpack.c.l.b16 %v1158
  %v1230 = vunpack.c.l.b16 %v1159
  %v1231 = vunpack.c.l.b16 %v1160
  %v1232 = vunpack.c.l.b16 %v1161
  %v1233 = vunpack.c.l.b16 %v1162
  %v1234 = vunpack.c.l.b16 %v1163
  %v1235 = vunpack.c.l.b16 %v1164
  %v1236 = vunpack.c.l.b16 %v1165
  %v1237 = vunpack.c.l.b16 %v1166
  %v1238 = vunpack.c.l.b16 %v1167
  %v1239 = vunpack.c.l.b16 %v1168
  %v1240 = vunpack.c.l.b16 %v1169
  %v1241 = vunpack.c.l.b16 %v1170
  %v1242 = vunpack.c.l.b16 %v1171
  %v1243 = vunpack.c.l.b16 %v1172
  %v1244 = vunpack.c.l.b16 %v1173
  %v1245 = vpack.c.b16 %v1214, %v1213
  %v1246 = vpack.c.b16 %v1216, %v1215
  %v1247 = vpack.c.b16 %v1218, %v1217
  %v1248 = vpack.c.b16 %v1220, %v1219
  %v1249 = vpack.c.b16 %v1222, %v1221
  %v1250 = vpack.c.b16 %v1224, %v1223
  %v1251 = vpack.c.b16 %v1226, %v1225
  %v1252 = vpack.c.b16 %v1228, %v1227
  %v1253 = vpack.c.b16 %v1230, %v1229
  %v1254 = vpack.c.b16 %v1232, %v1231
  %v1255 = vpack.c.b16 %v1234, %v1233
  %v1256 = vpack.c.b16 %v1236, %v1235
  %v1257 = vpack.c.b16 %v1238, %v1237
  %v1258 = vpack.c.b16 %v1240, %v1239
  %v1259 = vpack.c.b16 %v1242, %v1241
  %v1260 = vpack.c.b16 %v1244, %v1243
  %1277 = vmatprep.subr.bf16.mxu0 0
  %1278 = vmatpush1.bf16.msra.mxu0 %v1245
  %1279 = vmatprep.subr.bf16.mxu0 0
  %1280 = vmatpush1.bf16.msra.mxu0 %v1246
  %1281 = vmatprep.subr.bf16.mxu0 0
  %1282 = vmatpush1.bf16.msra.mxu0 %v1247
  %1283 = vmatprep.subr.bf16.mxu0 0
  %1284 = vmatpush1.bf16.msra.mxu0 %v1248
  %1285 = vmatprep.subr.bf16.mxu0 0
  %1286 = vmatpush1.bf16.msra.mxu0 %v1249
  %1287 = vmatprep.subr.bf16.mxu0 0
  %1288 = vmatpush1.bf16.msra.mxu0 %v1250
  %1289 = vmatprep.subr.bf16.mxu0 0
  %1290 = vmatpush1.bf16.msra.mxu0 %v1251
  %1291 = vmatprep.subr.bf16.mxu0 0
  %1292 = vmatpush1.bf16.msra.mxu0 %v1252
  %1293 = vmatprep.subr.bf16.mxu0 0
  %1294 = vmatpush1.bf16.msra.mxu0 %v1253
  %1295 = vmatprep.subr.bf16.mxu0 0
  %1296 = vmatpush1.bf16.msra.mxu0 %v1254
  %1297 = vmatprep.subr.bf16.mxu0 0
  %1298 = vmatpush1.bf16.msra.mxu0 %v1255
  %1299 = vmatprep.subr.bf16.mxu0 0
  %1300 = vmatpush1.bf16.msra.mxu0 %v1256
  %1301 = vmatprep.subr.bf16.mxu0 0
  %1302 = vmatpush1.bf16.msra.mxu0 %v1257
  %1303 = vmatprep.subr.bf16.mxu0 0
  %1304 = vmatpush1.bf16.msra.mxu0 %v1258
  %1305 = vmatprep.subr.bf16.mxu0 0
  %1306 = vmatpush1.bf16.msra.mxu0 %v1259
  %1307 = vmatprep.subr.bf16.mxu0 0
  %1308 = vmatpush1.bf16.msra.mxu0 %v1260
  %1309 = vmatprep.mubr.bf16.mxu0 %v1111
  %1310 = vmatmul.mubr.bf16.gmra.mrb[0].mxu0 %v1110
  %v1311 = vpop.f32.mrb[0].mxu0
  %v1312 = vadd.f32 %v1179, %v1311
  %v1313 = vpop.f32.mrb[0].mxu0
  %v1314 = vpop.f32.mrb[0].mxu0
  %v1315 = vadd.f32 %v1179, %v1314
  %v1316 = vpop.f32.mrb[0].mxu0
  %1317 = vmatprep.mubr.bf16.mxu0 %v1113
  %1318 = vmatmul.mubr.bf16.gmra.mrb[0].mxu0 %v1112
  %v1319 = vpop.f32.mrb[0].mxu0
  %v1320 = vadd.f32 %v1179, %v1319
  %v1321 = vpop.f32.mrb[0].mxu0
  %v1322 = vpop.f32.mrb[0].mxu0
  %v1323 = vadd.f32 %v1179, %v1322
  %v1324 = vpop.f32.mrb[0].mxu0
  %1325 = vmatprep.mubr.bf16.mxu0 %v1115
  %1326 = vmatmul.mubr.bf16.gmra.mrb[0].mxu0 %v1114
  %v1327 = vpop.f32.mrb[0].mxu0
  %v1328 = vadd.f32 %v1179, %v1327
  %v1329 = vpop.f32.mrb[0].mxu0
  %v1330 = vpop.f32.mrb[0].mxu0
  %v1331 = vadd.f32 %v1179, %v1330
  %v1332 = vpop.f32.mrb[0].mxu0
  %1333 = vmatprep.mubr.bf16.mxu0 %v1117
  %1334 = vmatmul.mubr.bf16.gmra.mrb[0].mxu0 %v1116
  %v1335 = vpop.f32.mrb[0].mxu0
  %v1336 = vadd.f32 %v1179, %v1335
  %v1337 = vpop.f32.mrb[0].mxu0
  %v1338 = vpop.f32.mrb[0].mxu0
  %v1339 = vadd.f32 %v1179, %v1338
  %v1340 = vpop.f32.mrb[0].mxu0
  %1341 = vmatprep.mubr.bf16.mxu0 %v1119
  %1342 = vmatmul.mubr.bf16.gmra.mrb[0].mxu0 %v1118
  %v1343 = vpop.f32.mrb[0].mxu0
  %v1344 = vadd.f32 %v1179, %v1343
  %v1345 = vpop.f32.mrb[0].mxu0
  %v1346 = vpop.f32.mrb[0].mxu0
  %v1347 = vadd.f32 %v1179, %v1346
  %v1348 = vpop.f32.mrb[0].mxu0
  %1349 = vmatprep.mubr.bf16.mxu0 %v1121
  %1350 = vmatmul.mubr.bf16.gmra.mrb[0].mxu0 %v1120
  %v1351 = vpop.f32.mrb[0].mxu0
  %v1352 = vadd.f32 %v1179, %v1351
  %v1353 = vpop.f32.mrb[0].mxu0
  %v1354 = vpop.f32.mrb[0].mxu0
  %v1355 = vadd.f32 %v1179, %v1354
  %v1356 = vpop.f32.mrb[0].mxu0
  %1357 = vmatprep.mubr.bf16.mxu0 %v1123
  %1358 = vmatmul.mubr.bf16.gmra.mrb[0].mxu0 %v1122
  %v1359 = vpop.f32.mrb[0].mxu0
  %v1360 = vadd.f32 %v1179, %v1359
  %v1361 = vpop.f32.mrb[0].mxu0
  %v1362 = vpop.f32.mrb[0].mxu0
  %v1363 = vadd.f32 %v1179, %v1362
  %v1364 = vpop.f32.mrb[0].mxu0
  %1365 = vmatprep.mubr.bf16.mxu0 %v1125
  %1366 = vmatmul.mubr.bf16.gmra.mrb[0].mxu0 %v1124
  %v1367 = vpop.f32.mrb[0].mxu0
  %v1368 = vadd.f32 %v1179, %v1367
  %v1369 = vpop.f32.mrb[0].mxu0
  %v1370 = vpop.f32.mrb[0].mxu0
  %v1371 = vadd.f32 %v1179, %v1370
  %v1372 = vpop.f32.mrb[0].mxu0
  %1373 = vmatprep.mubr.bf16.mxu0 %v1127
  %1374 = vmatmul.mubr.bf16.gmra.mrb[0].mxu0 %v1126
  %v1375 = vpop.f32.mrb[0].mxu0
  %v1376 = vadd.f32 %v1179, %v1375
  %v1377 = vpop.f32.mrb[0].mxu0
  %v1378 = vpop.f32.mrb[0].mxu0
  %v1379 = vadd.f32 %v1179, %v1378
  %v1380 = vpop.f32.mrb[0].mxu0
  %1381 = vmatprep.mubr.bf16.mxu0 %v1129
  %1382 = vmatmul.mubr.bf16.gmra.mrb[0].mxu0 %v1128
  %v1383 = vpop.f32.mrb[0].mxu0
  %v1384 = vadd.f32 %v1179, %v1383
  %v1385 = vpop.f32.mrb[0].mxu0
  %v1386 = vpop.f32.mrb[0].mxu0
  %v1387 = vadd.f32 %v1179, %v1386
  %v1388 = vpop.f32.mrb[0].mxu0
  %1389 = vmatprep.mubr.bf16.mxu0 %v1131
  %1390 = vmatmul.mubr.bf16.gmra.mrb[0].mxu0 %v1130
  %v1391 = vpop.f32.mrb[0].mxu0
  %v1392 = vadd.f32 %v1179, %v1391
  %v1393 = vpop.f32.mrb[0].mxu0
  %v1394 = vpop.f32.mrb[0].mxu0
  %v1395 = vadd.f32 %v1179, %v1394
  %v1396 = vpop.f32.mrb[0].mxu0
  %1397 = vmatprep.mubr.bf16.mxu0 %v1133
  %1398 = vmatmul.mubr.bf16.gmra.mrb[0].mxu0 %v1132
  %v1399 = vpop.f32.mrb[0].mxu0
  %v1400 = vadd.f32 %v1179, %v1399
  %v1401 = vpop.f32.mrb[0].mxu0
  %v1402 = vpop.f32.mrb[0].mxu0
  %v1403 = vadd.f32 %v1179, %v1402
  %v1404 = vpop.f32.mrb[0].mxu0
  %1405 = vmatprep.mubr.bf16.mxu0 %v1135
  %1406 = vmatmul.mubr.bf16.gmra.mrb[0].mxu0 %v1134
  %v1407 = vpop.f32.mrb[0].mxu0
  %v1408 = vadd.f32 %v1179, %v1407
  %v1409 = vpop.f32.mrb[0].mxu0
  %v1410 = vpop.f32.mrb[0].mxu0
  %v1411 = vadd.f32 %v1179, %v1410
  %v1412 = vpop.f32.mrb[0].mxu0
  %1413 = vmatprep.mubr.bf16.mxu0 %v1137
  %1414 = vmatmul.mubr.bf16.gmra.mrb[0].mxu0 %v1136
  %v1415 = vpop.f32.mrb[0].mxu0
  %v1416 = vadd.f32 %v1179, %v1415
  %v1417 = vpop.f32.mrb[0].mxu0
  %v1418 = vpop.f32.mrb[0].mxu0
  %v1419 = vadd.f32 %v1179, %v1418
  %v1420 = vpop.f32.mrb[0].mxu0
  %1421 = vmatprep.mubr.bf16.mxu0 %v1139
  %1422 = vmatmul.mubr.bf16.gmra.mrb[0].mxu0 %v1138
  %v1423 = vpop.f32.mrb[0].mxu0
  %v1424 = vadd.f32 %v1179, %v1423
  %v1425 = vpop.f32.mrb[0].mxu0
  %v1426 = vpop.f32.mrb[0].mxu0
  %v1427 = vadd.f32 %v1179, %v1426
  %v1428 = vpop.f32.mrb[0].mxu0
  %1429 = vmatprep.mubr.bf16.mxu0 %v1141
  %1430 = vmatmul.mubr.bf16.gmra.mrb[0].mxu0 %v1140
  %v1431 = vpop.f32.mrb[0].mxu0
  %v1432 = vadd.f32 %v1179, %v1431
  %v1433 = vpop.f32.mrb[0].mxu0
  %v1434 = vpop.f32.mrb[0].mxu0
  %v1435 = vadd.f32 %v1179, %v1434
  %v1436 = vpop.f32.mrb[0].mxu0
  %1437 = vdwg.mxu0
  %v1438 = vmax.f32 %v1312, 0.0
  %v1439 = vmax.f32 %v1315, 0.0
  %v1440 = vmax.f32 %v1320, 0.0
  %v1441 = vmax.f32 %v1323, 0.0
  %v1442 = vmax.f32 %v1328, 0.0
  %v1443 = vmax.f32 %v1331, 0.0
  %v1444 = vmax.f32 %v1336, 0.0
  %v1445 = vmax.f32 %v1339, 0.0
  %v1446 = vmax.f32 %v1344, 0.0
  %v1447 = vmax.f32 %v1347, 0.0
  %v1448 = vmax.f32 %v1352, 0.0
  %v1449 = vmax.f32 %v1355, 0.0
  %v1450 = vmax.f32 %v1360, 0.0
  %v1451 = vmax.f32 %v1363, 0.0
  %v1452 = vmax.f32 %v1368, 0.0
  %v1453 = vmax.f32 %v1371, 0.0
  %v1454 = vmax.f32 %v1376, 0.0
  %v1455 = vmax.f32 %v1379, 0.0
  %v1456 = vmax.f32 %v1384, 0.0
  %v1457 = vmax.f32 %v1387, 0.0
  %v1458 = vmax.f32 %v1392, 0.0
  %v1459 = vmax.f32 %v1395, 0.0
  %v1460 = vmax.f32 %v1400, 0.0
  %v1461 = vmax.f32 %v1403, 0.0
  %v1462 = vmax.f32 %v1408, 0.0
  %v1463 = vmax.f32 %v1411, 0.0
  %v1464 = vmax.f32 %v1416, 0.0
  %v1465 = vmax.f32 %v1419, 0.0
  %v1466 = vmax.f32 %v1424, 0.0
  %v1467 = vmax.f32 %v1427, 0.0
  %v1468 = vmax.f32 %v1432, 0.0
  %v1469 = vmax.f32 %v1435, 0.0
  %v1470 = vpack.c.bf16 %v1439, %v1438
  %v1471 = vpack.c.bf16 %v1441, %v1440
  %v1472 = vpack.c.bf16 %v1443, %v1442
  %v1473 = vpack.c.bf16 %v1445, %v1444
  %v1474 = vpack.c.bf16 %v1447, %v1446
  %v1475 = vpack.c.bf16 %v1449, %v1448
  %v1476 = vpack.c.bf16 %v1451, %v1450
  %v1477 = vpack.c.bf16 %v1453, %v1452
  %v1478 = vpack.c.bf16 %v1455, %v1454
  %v1479 = vpack.c.bf16 %v1457, %v1456
  %v1480 = vpack.c.bf16 %v1459, %v1458
  %v1481 = vpack.c.bf16 %v1461, %v1460
  %v1482 = vpack.c.bf16 %v1463, %v1462
  %v1483 = vpack.c.bf16 %v1465, %v1464
  %v1484 = vpack.c.bf16 %v1467, %v1466
  %v1485 = vpack.c.bf16 %v1469, %v1468
  %v1502 = vunpack.c.l.b16 %v1470
  %v1503 = vunpack.c.h.b16 %v1470
  %v1504 = vunpack.c.l.b16 %v1471
  %v1505 = vunpack.c.h.b16 %v1471
  %v1506 = vunpack.c.l.b16 %v1472
  %v1507 = vunpack.c.h.b16 %v1472
  %v1508 = vunpack.c.l.b16 %v1473
  %v1509 = vunpack.c.h.b16 %v1473
  %v1510 = vunpack.c.l.b16 %v1474
  %v1511 = vunpack.c.h.b16 %v1474
  %v1512 = vunpack.c.l.b16 %v1475
  %v1513 = vunpack.c.h.b16 %v1475
  %v1514 = vunpack.c.l.b16 %v1476
  %v1515 = vunpack.c.h.b16 %v1476
  %v1516 = vunpack.c.l.b16 %v1477
  %v1517 = vunpack.c.h.b16 %v1477
  %v1518 = vunpack.c.l.b16 %v1478
  %v1519 = vunpack.c.h.b16 %v1478
  %v1520 = vunpack.c.l.b16 %v1479
  %v1521 = vunpack.c.h.b16 %v1479
  %v1522 = vunpack.c.l.b16 %v1480
  %v1523 = vunpack.c.h.b16 %v1480
  %v1524 = vunpack.c.l.b16 %v1481
  %v1525 = vunpack.c.h.b16 %v1481
  %v1526 = vunpack.c.l.b16 %v1482
  %v1527 = vunpack.c.h.b16 %v1482
  %v1528 = vunpack.c.l.b16 %v1483
  %v1529 = vunpack.c.h.b16 %v1483
  %v1530 = vunpack.c.l.b16 %v1484
  %v1531 = vunpack.c.h.b16 %v1484
  %v1532 = vunpack.c.l.b16 %v1485
  %v1533 = vunpack.c.h.b16 %v1485
  %v1534 = vpack.c.b16 %v1502, %v1502
  %v1535 = vpack.c.b16 %v1503, %v1503
  %v1536 = vpack.c.b16 %v1504, %v1504
  %v1537 = vpack.c.b16 %v1505, %v1505
  %v1538 = vpack.c.b16 %v1506, %v1506
  %v1539 = vpack.c.b16 %v1507, %v1507
  %v1540 = vpack.c.b16 %v1508, %v1508
  %v1541 = vpack.c.b16 %v1509, %v1509
  %v1542 = vpack.c.b16 %v1510, %v1510
  %v1543 = vpack.c.b16 %v1511, %v1511
  %v1544 = vpack.c.b16 %v1512, %v1512
  %v1545 = vpack.c.b16 %v1513, %v1513
  %v1546 = vpack.c.b16 %v1514, %v1514
  %v1547 = vpack.c.b16 %v1515, %v1515
  %v1548 = vpack.c.b16 %v1516, %v1516
  %v1549 = vpack.c.b16 %v1517, %v1517
  %v1550 = vpack.c.b16 %v1518, %v1518
  %v1551 = vpack.c.b16 %v1519, %v1519
  %v1552 = vpack.c.b16 %v1520, %v1520
  %v1553 = vpack.c.b16 %v1521, %v1521
  %v1554 = vpack.c.b16 %v1522, %v1522
  %v1555 = vpack.c.b16 %v1523, %v1523
  %v1556 = vpack.c.b16 %v1524, %v1524
  %v1557 = vpack.c.b16 %v1525, %v1525
  %v1558 = vpack.c.b16 %v1526, %v1526
  %v1559 = vpack.c.b16 %v1527, %v1527
  %v1560 = vpack.c.b16 %v1528, %v1528
  %v1561 = vpack.c.b16 %v1529, %v1529
  %v1562 = vpack.c.b16 %v1530, %v1530
  %v1563 = vpack.c.b16 %v1531, %v1531
  %v1564 = vpack.c.b16 %v1532, %v1532
  %v1565 = vpack.c.b16 %v1533, %v1533
  %vm1598 = vcmask 125952
  %1599 = vst.msk [vmem:[%s9] sm:$0xf] %vm1598, %v1534
  %1600 = vst.msk [vmem:[%s9 + $0x4] sm:$0xf] %vm1598, %v1535
  %1601 = vst.msk [vmem:[%s9 + $0x8] sm:$0xf] %vm1598, %v1536
  %1602 = vst.msk [vmem:[%s9 + $0xc] sm:$0xf] %vm1598, %v1537
  %1603 = vst.msk [vmem:[%s9 + $0x10] sm:$0xf] %vm1598, %v1538
  %1604 = vst.msk [vmem:[%s9 + $0x14] sm:$0xf] %vm1598, %v1539
  %1605 = vst.msk [vmem:[%s9 + $0x18] sm:$0xf] %vm1598, %v1540
  %1606 = vst.msk [vmem:[%s9 + $0x1c] sm:$0xf] %vm1598, %v1541
  %1607 = vst.msk [vmem:[%s9 + $0x20] sm:$0xf] %vm1598, %v1542
  %1608 = vst.msk [vmem:[%s9 + $0x24] sm:$0xf] %vm1598, %v1543
  %1609 = vst.msk [vmem:[%s9 + $0x28] sm:$0xf] %vm1598, %v1544
  %1610 = vst.msk [vmem:[%s9 + $0x2c] sm:$0xf] %vm1598, %v1545
  %1611 = vst.msk [vmem:[%s9 + $0x30] sm:$0xf] %vm1598, %v1546
  %1612 = vst.msk [vmem:[%s9 + $0x34] sm:$0xf] %vm1598, %v1547
  %1613 = vst.msk [vmem:[%s9 + $0x38] sm:$0xf] %vm1598, %v1548
  %1614 = vst.msk [vmem:[%s9 + $0x3c] sm:$0xf] %vm1598, %v1549
  %1615 = vst.msk [vmem:[%s9 + $0x40] sm:$0xf] %vm1598, %v1550
  %1616 = vst.msk [vmem:[%s9 + $0x44] sm:$0xf] %vm1598, %v1551
  %1617 = vst.msk [vmem:[%s9 + $0x48] sm:$0xf] %vm1598, %v1552
  %1618 = vst.msk [vmem:[%s9 + $0x4c] sm:$0xf] %vm1598, %v1553
  %1619 = vst.msk [vmem:[%s9 + $0x50] sm:$0xf] %vm1598, %v1554
  %1620 = vst.msk [vmem:[%s9 + $0x54] sm:$0xf] %vm1598, %v1555
  %1621 = vst.msk [vmem:[%s9 + $0x58] sm:$0xf] %vm1598, %v1556
  %1622 = vst.msk [vmem:[%s9 + $0x5c] sm:$0xf] %vm1598, %v1557
  %1623 = vst.msk [vmem:[%s9 + $0x60] sm:$0xf] %vm1598, %v1558
  %1624 = vst.msk [vmem:[%s9 + $0x64] sm:$0xf] %vm1598, %v1559
  %1625 = vst.msk [vmem:[%s9 + $0x68] sm:$0xf] %vm1598, %v1560
  %1626 = vst.msk [vmem:[%s9 + $0x6c] sm:$0xf] %vm1598, %v1561
  %1627 = vst.msk [vmem:[%s9 + $0x70] sm:$0xf] %vm1598, %v1562
  %1628 = vst.msk [vmem:[%s9 + $0x74] sm:$0xf] %vm1598, %v1563
  %1629 = vst.msk [vmem:[%s9 + $0x78] sm:$0xf] %vm1598, %v1564
  %1630 = vst.msk [vmem:[%s9 + $0x7c] sm:$0xf] %vm1598, %v1565
  // Predicated region
  $region38: #{cylinder3d_forward.2} parent=0 // pred_check
    _
  $region39: #{cylinder3d_forward.2} parent=0 // pred_check_branch
    %1632 = sbr.rel (0) target = $region41
  $region40: #{cylinder3d_forward.2} parent=0 // pred_region
    _
  $region41: #{cylinder3d_forward.2} parent=0 // pred_fallthru
    _
  // Predicated region
  $region42: #{cylinder3d_forward.2} parent=0 // pred_check
    _
  $region43: #{cylinder3d_forward.2} parent=0 // pred_check_branch
    %1634 = sbr.rel (0) target = $region45
  $region44: #{cylinder3d_forward.2} parent=0 // pred_region
    _
  $region45: #{cylinder3d_forward.2} parent=0 // pred_fallthru
    _

// kernel: cylinder3d_forward.3
$region0: #{cylinder3d_forward.3}
  #allocation0 [shape = 'u32[]', space=smem, size = 0x4, offset = 0x4, fixed_abs, tag = 'smem constant byte address 0x4 - core index']
  #allocation1 [shape = 'u32[144,128]{1,0:T(1,128)}', space=vmem, size = 0x12000, scoped, tag = 'internal scratch']
  %s0 = inlined_call_operand.vmem [shape: bf16[2,512,16], index: 0, kind: input, shape index: {}]
  %s1 = inlined_call_operand.vmem [shape: bf16[16,32], index: 1, kind: input, shape index: {}]
  %s2 = inlined_call_operand.vmem [shape: f32[1,32], index: 2, kind: input, shape index: {}]
  %s3 = inlined_call_operand.vmem [shape: bf16[4,32], index: 3, kind: input, shape index: {}]
  %s4 = inlined_call_operand.vmem [shape: f32[4,1], index: 4, kind: input, shape index: {}]
  %s5 = inlined_call_operand.vmem [shape: bf16[2,4,512], index: 5, kind: output, shape index: {}]
  %s6 = sld [smem:[#allocation0]]
  $region53: #{cylinder3d_forward.3} parent=0
    _
  %s8 = ssub.s32 1, %s6
  %s9 = scalar_select 0, %s8, %s6
  loop: start=0, step=1, limit=4
  $region2: #{cylinder3d_forward.3} parent=0 // loop_pre_header
    _
  $region3: #{cylinder3d_forward.3} parent=0 // loop_header
    %s11 = sphi 0, %s15
    %p12 = scmp.ge.s32.totalorder %s11, 4
    %s18 = sphi 0, %s30
    %s19 = sphi 0, %s26
    %s20 = sphi 0, %s18
    %s21 = sphi 0, %s19
    %s22 = sphi 0, %s20
    %s23 = sphi 0, %s21
    %s35 = sphi 0, %s37
    %s38 = sphi 0, %s35
    %s39 = sphi 0, %s38
    %s55 = sphi 0, %s39
    %s59 = sphi 0, %s59
    %s61 = sphi 0, %s59
    %s62 = sphi 0, %s61
    %s76 = sphi 0, %s62
    %s80 = sphi 0, %s80
    %s82 = sphi 0, %s80
    %s83 = sphi 0, %s82
    %s97 = sphi 0, %s83
    %s101 = sphi 0, %s101
    %s103 = sphi 0, %s101
    %s104 = sphi 0, %s103
    %s118 = sphi 0, %s104
    %s122 = sphi 0, %s122
    %s124 = sphi 0, %s122
    %s125 = sphi 0, %s124
    %s139 = sphi 0, %s125
    %s147 = sphi 0, %s149
    %s150 = sphi 0, %s147
    %s151 = sphi 0, %s150
    %s167 = sphi 0, %s151
  $region4: #{cylinder3d_forward.3} parent=0 // loop_header_branch
    %14 = sbr.rel (%p12) target = $region8
  $region5: #{cylinder3d_forward.3} parent=0 // loop_body
    %s16 = ssub.s32 %s11, 1
    %s17 = ssub.s32 %s11, 2
    %s24 = sadd.s32 1, %s19
    %p25 = scmp.ge.s32.totalorder %s24, 1
    %s26 = scalar_select %p25, 0, %s24
    %s27 = sadd.s32 1, %s18
    %s28 = scalar_select %p25, %s27, %s18
    %p29 = scmp.ge.s32.totalorder %s28, 2
    %s30 = scalar_select %p29, 0, %s28
    %s31 = ssub.s32 %s18, %s30
    %s32 = ssub.s32 %s19, %s26
    %s33 = sor.u32 %s31, %s32
    %p34 = scmp.eq.s32.totalorder %s33, 0
    %s36 = sadd.s32 %s35, 1
    %s37 = scalar_select %p34, %s35, %s36
    %p40 = pneg %p34
    %p41 = scmp.eq.s32.totalorder %s11, 1
    %p42 = por %p40, %p41
    %p43 = scmp.ne.s32.totalorder %s35, %s38
    %p44 = scmp.eq.s32.totalorder %s11, 0
    %p45 = por %p43, %p44
    %p46 = scmp.ne.s32.totalorder %s35, %s38
    %p47 = scmp.eq.s32.totalorder %s16, 1
    %p48 = por %p46, %p47
    %p49 = scmp.ne.s32.totalorder %s38, %s39
    %p50 = scmp.eq.s32.totalorder %s16, 0
    %p51 = por %p49, %p50
    %p52 = scmp.ne.s32.totalorder %s38, %s39
    %p53 = scmp.eq.s32.totalorder %s17, 1
    %p54 = por %p52, %p53
    %p56 = scmp.ne.s32.totalorder %s39, %s55
    %p57 = scmp.eq.s32.totalorder %s17, 0
    %p58 = por %p56, %p57
    %s60 = sadd.s32 %s59, 1
    %p63 = scmp.eq.s32.totalorder %s11, 1
    %p64 = scmp.ne.s32.totalorder %s59, %s61
    %p65 = scmp.eq.s32.totalorder %s11, 0
    %p66 = por %p64, %p65
    %p67 = scmp.ne.s32.totalorder %s59, %s61
    %p68 = scmp.eq.s32.totalorder %s16, 1
    %p69 = por %p67, %p68
    %p70 = scmp.ne.s32.totalorder %s61, %s62
    %p71 = scmp.eq.s32.totalorder %s16, 0
    %p72 = por %p70, %p71
    %p73 = scmp.ne.s32.totalorder %s61, %s62
    %p74 = scmp.eq.s32.totalorder %s17, 1
    %p75 = por %p73, %p74
    %p77 = scmp.ne.s32.totalorder %s62, %s76
    %p78 = scmp.eq.s32.totalorder %s17, 0
    %p79 = por %p77, %p78
    %s81 = sadd.s32 %s80, 1
    %p84 = scmp.eq.s32.totalorder %s11, 1
    %p85 = scmp.ne.s32.totalorder %s80, %s82
    %p86 = scmp.eq.s32.totalorder %s11, 0
    %p87 = por %p85, %p86
    %p88 = scmp.ne.s32.totalorder %s80, %s82
    %p89 = scmp.eq.s32.totalorder %s16, 1
    %p90 = por %p88, %p89
    %p91 = scmp.ne.s32.totalorder %s82, %s83
    %p92 = scmp.eq.s32.totalorder %s16, 0
    %p93 = por %p91, %p92
    %p94 = scmp.ne.s32.totalorder %s82, %s83
    %p95 = scmp.eq.s32.totalorder %s17, 1
    %p96 = por %p94, %p95
    %p98 = scmp.ne.s32.totalorder %s83, %s97
    %p99 = scmp.eq.s32.totalorder %s17, 0
    %p100 = por %p98, %p99
    %s102 = sadd.s32 %s101, 1
    %p105 = scmp.eq.s32.totalorder %s11, 1
    %p106 = scmp.ne.s32.totalorder %s101, %s103
    %p107 = scmp.eq.s32.totalorder %s11, 0
    %p108 = por %p106, %p107
    %p109 = scmp.ne.s32.totalorder %s101, %s103
    %p110 = scmp.eq.s32.totalorder %s16, 1
    %p111 = por %p109, %p110
    %p112 = scmp.ne.s32.totalorder %s103, %s104
    %p113 = scmp.eq.s32.totalorder %s16, 0
    %p114 = por %p112, %p113
    %p115 = scmp.ne.s32.totalorder %s103, %s104
    %p116 = scmp.eq.s32.totalorder %s17, 1
    %p117 = por %p115, %p116
    %p119 = scmp.ne.s32.totalorder %s104, %s118
    %p120 = scmp.eq.s32.totalorder %s17, 0
    %p121 = por %p119, %p120
    %s123 = sadd.s32 %s122, 1
    %p126 = scmp.eq.s32.totalorder %s11, 1
    %p127 = scmp.ne.s32.totalorder %s122, %s124
    %p128 = scmp.eq.s32.totalorder %s11, 0
    %p129 = por %p127, %p128
    %p130 = scmp.ne.s32.totalorder %s122, %s124
    %p131 = scmp.eq.s32.totalorder %s16, 1
    %p132 = por %p130, %p131
    %p133 = scmp.ne.s32.totalorder %s124, %s125
    %p134 = scmp.eq.s32.totalorder %s16, 0
    %p135 = por %p133, %p134
    %p136 = scmp.ne.s32.totalorder %s124, %s125
    %p137 = scmp.eq.s32.totalorder %s17, 1
    %p138 = por %p136, %p137
    %p140 = scmp.ne.s32.totalorder %s125, %s139
    %p141 = scmp.eq.s32.totalorder %s17, 0
    %p142 = por %p140, %p141
    %s143 = ssub.s32 %s18, %s30
    %s144 = ssub.s32 %s19, %s26
    %s145 = sor.u32 %s143, %s144
    %p146 = scmp.eq.s32.totalorder %s145, 0
    %s148 = sadd.s32 %s147, 1
    %s149 = scalar_select %p146, %s147, %s148
    %p152 = pneg %p146
    %p153 = scmp.eq.s32.totalorder %s11, 1
    %p154 = por %p152, %p153
    %p155 = scmp.ne.s32.totalorder %s147, %s150
    %p156 = scmp.eq.s32.totalorder %s11, 0
    %p157 = por %p155, %p156
    %p158 = scmp.ne.s32.totalorder %s147, %s150
    %p159 = scmp.eq.s32.totalorder %s16, 1
    %p160 = por %p158, %p159
    %p161 = scmp.ne.s32.totalorder %s150, %s151
    %p162 = scmp.eq.s32.totalorder %s16, 0
    %p163 = por %p161, %p162
    %p164 = scmp.ne.s32.totalorder %s150, %s151
    %p165 = scmp.eq.s32.totalorder %s17, 1
    %p166 = por %p164, %p165
    %p168 = scmp.ne.s32.totalorder %s151, %s167
    %p169 = scmp.eq.s32.totalorder %s17, 0
    %p170 = por %p168, %p169
    %p171 = scmp.le.s32.totalorder 1, %s11
    %p172 = scmp.lt.s32.totalorder %s11, 3
    %p173 = pnand %p171, %p172
    %p174 = pneg %p173
    // Predicated region
    $region9: #{cylinder3d_forward.3} parent=5 // pred_check
      _
    $region10: #{cylinder3d_forward.3} parent=5 // pred_check_branch
      %176 = sbr.rel (%p173) target = $region12
    $region11: #{cylinder3d_forward.3} parent=5 // pred_region
      %s177 = ssub.s32 %s11, 1
      // Predicated region
      $region13: #{cylinder3d_forward.3} parent=11 // pred_check
        %p178 = pneg %p72
      $region14: #{cylinder3d_forward.3} parent=11 // pred_check_branch
        %180 = sbr.rel (%p178) target = $region16
      $region15: #{cylinder3d_forward.3} parent=11 // pred_region
        _
      $region16: #{cylinder3d_forward.3} parent=11 // pred_fallthru
        _
      // Predicated region
      $region17: #{cylinder3d_forward.3} parent=11 // pred_check
        %p181 = pneg %p93
      $region18: #{cylinder3d_forward.3} parent=11 // pred_check_branch
        %183 = sbr.rel (%p181) target = $region20
      $region19: #{cylinder3d_forward.3} parent=11 // pred_region
        _
      $region20: #{cylinder3d_forward.3} parent=11 // pred_fallthru
        _
      // Predicated region
      $region21: #{cylinder3d_forward.3} parent=11 // pred_check
        %p184 = pneg %p114
      $region22: #{cylinder3d_forward.3} parent=11 // pred_check_branch
        %186 = sbr.rel (%p184) target = $region24
      $region23: #{cylinder3d_forward.3} parent=11 // pred_region
        _
      $region24: #{cylinder3d_forward.3} parent=11 // pred_fallthru
        _
      // Predicated region
      $region25: #{cylinder3d_forward.3} parent=11 // pred_check
        %p187 = pneg %p135
      $region26: #{cylinder3d_forward.3} parent=11 // pred_check_branch
        %189 = sbr.rel (%p187) target = $region28
      $region27: #{cylinder3d_forward.3} parent=11 // pred_region
        _
      $region28: #{cylinder3d_forward.3} parent=11 // pred_fallthru
        _
    $region12: #{cylinder3d_forward.3} parent=5 // pred_fallthru
      _
    %p190 = scmp.lt.s32.totalorder %s11, 2
    // Predicated region
    $region29: #{cylinder3d_forward.3} parent=5 // pred_check
      %p191 = pneg %p190
    $region30: #{cylinder3d_forward.3} parent=5 // pred_check_branch
      %193 = sbr.rel (%p191) target = $region32
    $region31: #{cylinder3d_forward.3} parent=5 // pred_region
      // Predicated region
      $region33: #{cylinder3d_forward.3} parent=31 // pred_check
        %p194 = pneg %p45
      $region34: #{cylinder3d_forward.3} parent=31 // pred_check_branch
        %196 = sbr.rel (%p194) target = $region36
      $region35: #{cylinder3d_forward.3} parent=31 // pred_region
        %s197 = smul.u32 64, %s19
        %p198 = scmp.lt.s32.totalorder %s18, 1
        %s199 = scalar_select %p198, %s18, 1
        %p200 = scmp.lt.s32.totalorder %s197, 63
        %s201 = scalar_select %p200, %s197, 63
        %s202 = smul.addr %s199, 64
        %s203 = sadd.s32 %s201, %s202
        %s204 = smul.addr %s203, 4
        %s205 = scalar_lea.vmem %s0, %s204
        %s206 = smul.u32 64, %s19
      $region36: #{cylinder3d_forward.3} parent=31 // pred_fallthru
        _
    $region32: #{cylinder3d_forward.3} parent=5 // pred_fallthru
      _
    %p207 = scmp.le.s32.totalorder 1, %s11
    %p208 = scmp.lt.s32.totalorder %s11, 3
    %p209 = pnand %p207, %p208
    %p210 = pneg %p209
    // Predicated region
    $region37: #{cylinder3d_forward.3} parent=5 // pred_check
      _
    $region38: #{cylinder3d_forward.3} parent=5 // pred_check_branch
      %212 = sbr.rel (%p209) target = $region40
    $region39: #{cylinder3d_forward.3} parent=5 // pred_region
      %s213 = ssub.s32 %s11, 1
      %s214 = smul.u32 64, %s21
      %p215 = scmp.lt.s32.totalorder %s20, 1
      %s216 = scalar_select %p215, %s20, 1
      %p217 = scmp.lt.s32.totalorder %s214, 63
      %s218 = scalar_select %p217, %s214, 63
      %s219 = smul.addr %s216, 64
      %s220 = sadd.s32 %s218, %s219
      %s221 = smul.addr %s220, 4
      %s222 = scalar_lea.vmem %s0, %s221
      %p223 = pneg %p51
      %p224 = pneg %p48
      %p225 = pneg %p72
      %p226 = pneg %p69
      %p227 = pneg %p93
      %p228 = pneg %p90
      %p229 = pneg %p114
      %p230 = pneg %p111
      %p231 = pneg %p135
      %p232 = pneg %p132
      %p233 = pneg %p163
      %p234 = pneg %p160
      %s235 = smul.u32 4, %s21
      %p236 = scmp.lt.s32.totalorder %s20, 1
      %s237 = scalar_select %p236, %s20, 1
      %p238 = scmp.lt.s32.totalorder %s235, 3
      %s239 = scalar_select %p238, %s235, 3
      %s240 = smul.addr %s237, 4
      %s241 = sadd.s32 %s239, %s240
      %s242 = smul.addr %s241, 2
      %s243 = scalar_lea.vmem %s5, %s242
      %s244 = smul.u32 64, %s21
      %p245 = scmp.lt.s32.totalorder %s20, 1
      %s246 = scalar_select %p245, %s20, 1
      %p247 = scmp.lt.s32.totalorder %s244, 63
      %s248 = scalar_select %p247, %s244, 63
      %s249 = smul.addr %s246, 64
      %s250 = sadd.s32 %s248, %s249
      %s251 = smul.addr %s250, 4
      %s252 = scalar_lea.vmem %s0, %s251
      %s253 = smul.u32 64, %s21
      %s254 = smul.u32 4, %s21
      %p255 = scmp.lt.s32.totalorder %s20, 1
      %s256 = scalar_select %p255, %s20, 1
      %p257 = scmp.lt.s32.totalorder %s254, 3
      %s258 = scalar_select %p257, %s254, 3
      %s259 = smul.addr %s256, 4
      %s260 = sadd.s32 %s258, %s259
      %s261 = smul.addr %s260, 2
      %s262 = scalar_lea.vmem %s5, %s261
      %s263 = smul.u32 4, %s21
      %v265 = vld [vmem:[%s252] sm:$0xf]
      %v266 = vld [vmem:[%s252 + $0x4] sm:$0xf]
      %v267 = vld [vmem:[%s252 + $0x8] sm:$0xf]
      %v268 = vld [vmem:[%s252 + $0xc] sm:$0xf]
      %v269 = vld [vmem:[%s252 + $0x10] sm:$0xf]
      %v270 = vld [vmem:[%s252 + $0x14] sm:$0xf]
      %v271 = vld [vmem:[%s252 + $0x18] sm:$0xf]
      %v272 = vld [vmem:[%s252 + $0x1c] sm:$0xf]
      %v273 = vld [vmem:[%s252 + $0x20] sm:$0xf]
      %v274 = vld [vmem:[%s252 + $0x24] sm:$0xf]
      %v275 = vld [vmem:[%s252 + $0x28] sm:$0xf]
      %v276 = vld [vmem:[%s252 + $0x2c] sm:$0xf]
      %v277 = vld [vmem:[%s252 + $0x30] sm:$0xf]
      %v278 = vld [vmem:[%s252 + $0x34] sm:$0xf]
      %v279 = vld [vmem:[%s252 + $0x38] sm:$0xf]
      %v280 = vld [vmem:[%s252 + $0x3c] sm:$0xf]
      %v281 = vld [vmem:[%s252 + $0x40] sm:$0xf]
      %v282 = vld [vmem:[%s252 + $0x44] sm:$0xf]
      %v283 = vld [vmem:[%s252 + $0x48] sm:$0xf]
      %v284 = vld [vmem:[%s252 + $0x4c] sm:$0xf]
      %v285 = vld [vmem:[%s252 + $0x50] sm:$0xf]
      %v286 = vld [vmem:[%s252 + $0x54] sm:$0xf]
      %v287 = vld [vmem:[%s252 + $0x58] sm:$0xf]
      %v288 = vld [vmem:[%s252 + $0x5c] sm:$0xf]
      %v289 = vld [vmem:[%s252 + $0x60] sm:$0xf]
      %v290 = vld [vmem:[%s252 + $0x64] sm:$0xf]
      %v291 = vld [vmem:[%s252 + $0x68] sm:$0xf]
      %v292 = vld [vmem:[%s252 + $0x6c] sm:$0xf]
      %v293 = vld [vmem:[%s252 + $0x70] sm:$0xf]
      %v294 = vld [vmem:[%s252 + $0x74] sm:$0xf]
      %v295 = vld [vmem:[%s252 + $0x78] sm:$0xf]
      %v296 = vld [vmem:[%s252 + $0x7c] sm:$0xf]
      %v297 = vld [vmem:[%s252 + $0x80] sm:$0xf]
      %v298 = vld [vmem:[%s252 + $0x84] sm:$0xf]
      %v299 = vld [vmem:[%s252 + $0x88] sm:$0xf]
      %v300 = vld [vmem:[%s252 + $0x8c] sm:$0xf]
      %v301 = vld [vmem:[%s252 + $0x90] sm:$0xf]
      %v302 = vld [vmem:[%s252 + $0x94] sm:$0xf]
      %v303 = vld [vmem:[%s252 + $0x98] sm:$0xf]
      %v304 = vld [vmem:[%s252 + $0x9c] sm:$0xf]
      %v305 = vld [vmem:[%s252 + $0xa0] sm:$0xf]
      %v306 = vld [vmem:[%s252 + $0xa4] sm:$0xf]
      %v307 = vld [vmem:[%s252 + $0xa8] sm:$0xf]
      %v308 = vld [vmem:[%s252 + $0xac] sm:$0xf]
      %v309 = vld [vmem:[%s252 + $0xb0] sm:$0xf]
      %v310 = vld [vmem:[%s252 + $0xb4] sm:$0xf]
      %v311 = vld [vmem:[%s252 + $0xb8] sm:$0xf]
      %v312 = vld [vmem:[%s252 + $0xbc] sm:$0xf]
      %v313 = vld [vmem:[%s252 + $0xc0] sm:$0xf]
      %v314 = vld [vmem:[%s252 + $0xc4] sm:$0xf]
      %v315 = vld [vmem:[%s252 + $0xc8] sm:$0xf]
      %v316 = vld [vmem:[%s252 + $0xcc] sm:$0xf]
      %v317 = vld [vmem:[%s252 + $0xd0] sm:$0xf]
      %v318 = vld [vmem:[%s252 + $0xd4] sm:$0xf]
      %v319 = vld [vmem:[%s252 + $0xd8] sm:$0xf]
      %v320 = vld [vmem:[%s252 + $0xdc] sm:$0xf]
      %v321 = vld [vmem:[%s252 + $0xe0] sm:$0xf]
      %v322 = vld [vmem:[%s252 + $0xe4] sm:$0xf]
      %v323 = vld [vmem:[%s252 + $0xe8] sm:$0xf]
      %v324 = vld [vmem:[%s252 + $0xec] sm:$0xf]
      %v325 = vld [vmem:[%s252 + $0xf0] sm:$0xf]
      %v326 = vld [vmem:[%s252 + $0xf4] sm:$0xf]
      %v327 = vld [vmem:[%s252 + $0xf8] sm:$0xf]
      %v328 = vld [vmem:[%s252 + $0xfc] sm:$0xf]
      %v329 = vld [vmem:[%s1] sm:$0xf]
      %v330 = vld [vmem:[%s1 + $0x4] sm:$0xf]
      %v331 = vld [vmem:[%s2] sm:$0x1]
      %v333 = vlaneseq
      %v334 = vshrl.u32 %v333, 7
      %v335 = vsub.s32 0, %v334
      %v336 = vrot.slane %v331, %v335
      %v402 = vunpack.c.l.b16 %v265
      %v403 = vunpack.c.l.b16 %v266
      %v404 = vunpack.c.l.b16 %v267
      %v405 = vunpack.c.l.b16 %v268
      %v406 = vunpack.c.l.b16 %v269
      %v407 = vunpack.c.l.b16 %v270
      %v408 = vunpack.c.l.b16 %v271
      %v409 = vunpack.c.l.b16 %v272
      %v410 = vunpack.c.l.b16 %v273
      %v411 = vunpack.c.l.b16 %v274
      %v412 = vunpack.c.l.b16 %v275
      %v413 = vunpack.c.l.b16 %v276
      %v414 = vunpack.c.l.b16 %v277
      %v415 = vunpack.c.l.b16 %v278
      %v416 = vunpack.c.l.b16 %v279
      %v417 = vunpack.c.l.b16 %v280
      %v418 = vunpack.c.l.b16 %v281
      %v419 = vunpack.c.l.b16 %v282
      %v420 = vunpack.c.l.b16 %v283
      %v421 = vunpack.c.l.b16 %v284
      %v422 = vunpack.c.l.b16 %v285
      %v423 = vunpack.c.l.b16 %v286
      %v424 = vunpack.c.l.b16 %v287
      %v425 = vunpack.c.l.b16 %v288
      %v426 = vunpack.c.l.b16 %v289
      %v427 = vunpack.c.l.b16 %v290
      %v428 = vunpack.c.l.b16 %v291
      %v429 = vunpack.c.l.b16 %v292
      %v430 = vunpack.c.l.b16 %v293
      %v431 = vunpack.c.l.b16 %v294
      %v432 = vunpack.c.l.b16 %v295
      %v433 = vunpack.c.l.b16 %v296
      %v434 = vunpack.c.l.b16 %v297
      %v435 = vunpack.c.l.b16 %v298
      %v436 = vunpack.c.l.b16 %v299
      %v437 = vunpack.c.l.b16 %v300
      %v438 = vunpack.c.l.b16 %v301
      %v439 = vunpack.c.l.b16 %v302
      %v440 = vunpack.c.l.b16 %v303
      %v441 = vunpack.c.l.b16 %v304
      %v442 = vunpack.c.l.b16 %v305
      %v443 = vunpack.c.l.b16 %v306
      %v444 = vunpack.c.l.b16 %v307
      %v445 = vunpack.c.l.b16 %v308
      %v446 = vunpack.c.l.b16 %v309
      %v447 = vunpack.c.l.b16 %v310
      %v448 = vunpack.c.l.b16 %v311
      %v449 = vunpack.c.l.b16 %v312
      %v450 = vunpack.c.l.b16 %v313
      %v451 = vunpack.c.l.b16 %v314
      %v452 = vunpack.c.l.b16 %v315
      %v453 = vunpack.c.l.b16 %v316
      %v454 = vunpack.c.l.b16 %v317
      %v455 = vunpack.c.l.b16 %v318
      %v456 = vunpack.c.l.b16 %v319
      %v457 = vunpack.c.l.b16 %v320
      %v458 = vunpack.c.l.b16 %v321
      %v459 = vunpack.c.l.b16 %v322
      %v460 = vunpack.c.l.b16 %v323
      %v461 = vunpack.c.l.b16 %v324
      %v462 = vunpack.c.l.b16 %v325
      %v463 = vunpack.c.l.b16 %v326
      %v464 = vunpack.c.l.b16 %v327
      %v465 = vunpack.c.l.b16 %v328
      %v466 = vpack.c.b16 %v403, %v402
      %v467 = vpack.c.b16 %v405, %v404
      %v468 = vpack.c.b16 %v407, %v406
      %v469 = vpack.c.b16 %v409, %v408
      %v470 = vpack.c.b16 %v411, %v410
      %v471 = vpack.c.b16 %v413, %v412
      %v472 = vpack.c.b16 %v415, %v414
      %v473 = vpack.c.b16 %v417, %v416
      %v474 = vpack.c.b16 %v419, %v418
      %v475 = vpack.c.b16 %v421, %v420
      %v476 = vpack.c.b16 %v423, %v422
      %v477 = vpack.c.b16 %v425, %v424
      %v478 = vpack.c.b16 %v427, %v426
      %v479 = vpack.c.b16 %v429, %v428
      %v480 = vpack.c.b16 %v431, %v430
      %v481 = vpack.c.b16 %v433, %v432
      %v482 = vpack.c.b16 %v435, %v434
      %v483 = vpack.c.b16 %v437, %v436
      %v484 = vpack.c.b16 %v439, %v438
      %v485 = vpack.c.b16 %v441, %v440
      %v486 = vpack.c.b16 %v443, %v442
      %v487 = vpack.c.b16 %v445, %v444
      %v488 = vpack.c.b16 %v447, %v446
      %v489 = vpack.c.b16 %v449, %v448
      %v490 = vpack.c.b16 %v451, %v450
      %v491 = vpack.c.b16 %v453, %v452
      %v492 = vpack.c.b16 %v455, %v454
      %v493 = vpack.c.b16 %v457, %v456
      %v494 = vpack.c.b16 %v459, %v458
      %v495 = vpack.c.b16 %v461, %v460
      %v496 = vpack.c.b16 %v463, %v462
      %v497 = vpack.c.b16 %v465, %v464
      %v500 = vunpack.c.l.b16 %v329
      %v501 = vunpack.c.l.b16 %v330
      %v502 = vpack.c.b16 %v501, %v500
      %vm504 = vcmask 130048
      %v506 = vsel %vm504, %v466, 0
      %v509 = vsel %vm504, %v467, 0
      %v512 = vsel %vm504, %v468, 0
      %v515 = vsel %vm504, %v469, 0
      %v518 = vsel %vm504, %v470, 0
      %v521 = vsel %vm504, %v471, 0
      %v524 = vsel %vm504, %v472, 0
      %v527 = vsel %vm504, %v473, 0
      %v530 = vsel %vm504, %v474, 0
      %v533 = vsel %vm504, %v475, 0
      %v536 = vsel %vm504, %v476, 0
      %v539 = vsel %vm504, %v477, 0
      %v542 = vsel %vm504, %v478, 0
      %v545 = vsel %vm504, %v479, 0
      %v548 = vsel %vm504, %v480, 0
      %v551 = vsel %vm504, %v481, 0
      %v554 = vsel %vm504, %v482, 0
      %v557 = vsel %vm504, %v483, 0
      %v560 = vsel %vm504, %v484, 0
      %v563 = vsel %vm504, %v485, 0
      %v566 = vsel %vm504, %v486, 0
      %v569 = vsel %vm504, %v487, 0
      %v572 = vsel %vm504, %v488, 0
      %v575 = vsel %vm504, %v489, 0
      %v578 = vsel %vm504, %v490, 0
      %v581 = vsel %vm504, %v491, 0
      %v584 = vsel %vm504, %v492, 0
      %v587 = vsel %vm504, %v493, 0
      %v590 = vsel %vm504, %v494, 0
      %v593 = vsel %vm504, %v495, 0
      %v596 = vsel %vm504, %v496, 0
      %v599 = vsel %vm504, %v497, 0
      %601 = vmatprep.subr.bf16.mxu0 0
      %602 = vmatpush1.bf16.msra.mxu0 %v502
      %603 = vmatprep.subr.bf16.mxu0 0
      %604 = vmatpush1.bf16.msra.mxu0 0
      %605 = vmatprep.subr.bf16.mxu0 0
      %606 = vmatpush1.bf16.msra.mxu0 0
      %607 = vmatprep.subr.bf16.mxu0 0
      %608 = vmatpush1.bf16.msra.mxu0 0
      %609 = vmatprep.subr.bf16.mxu0 0
      %610 = vmatpush1.bf16.msra.mxu0 0
      %611 = vmatprep.subr.bf16.mxu0 0
      %612 = vmatpush1.bf16.msra.mxu0 0
      %613 = vmatprep.subr.bf16.mxu0 0
      %614 = vmatpush1.bf16.msra.mxu0 0
      %615 = vmatprep.subr.bf16.mxu0 0
      %616 = vmatpush1.bf16.msra.mxu0 0
      %617 = vmatprep.subr.bf16.mxu0 0
      %618 = vmatpush1.bf16.msra.mxu0 0
      %619 = vmatprep.subr.bf16.mxu0 0
      %620 = vmatpush1.bf16.msra.mxu0 0
      %621 = vmatprep.subr.bf16.mxu0 0
      %622 = vmatpush1.bf16.msra.mxu0 0
      %623 = vmatprep.subr.bf16.mxu0 0
      %624 = vmatpush1.bf16.msra.mxu0 0
      %625 = vmatprep.subr.bf16.mxu0 0
      %626 = vmatpush1.bf16.msra.mxu0 0
      %627 = vmatprep.subr.bf16.mxu0 0
      %628 = vmatpush1.bf16.msra.mxu0 0
      %629 = vmatprep.subr.bf16.mxu0 0
      %630 = vmatpush1.bf16.msra.mxu0 0
      %631 = vmatprep.subr.bf16.mxu0 0
      %632 = vmatpush1.bf16.msra.mxu0 0
      %633 = vmatprep.mubr.bf16.mxu0 0
      %634 = vmatmul.mubr.bf16.gmra.mrb[0].mxu0 %v506
      %v635 = vpop.f32.mrb[0].mxu0
      %v636 = vadd.f32 %v336, %v635
      %v637 = vpop.f32.mrb[0].mxu0
      %v638 = vpop.f32.mrb[0].mxu0
      %v639 = vadd.f32 %v336, %v638
      %v640 = vpop.f32.mrb[0].mxu0
      %641 = vmatprep.mubr.bf16.mxu0 0
      %642 = vmatmul.mubr.bf16.gmra.mrb[0].mxu0 %v509
      %v643 = vpop.f32.mrb[0].mxu0
      %v644 = vadd.f32 %v336, %v643
      %v645 = vpop.f32.mrb[0].mxu0
      %v646 = vpop.f32.mrb[0].mxu0
      %v647 = vadd.f32 %v336, %v646
      %v648 = vpop.f32.mrb[0].mxu0
      %649 = vmatprep.mubr.bf16.mxu0 0
      %650 = vmatmul.mubr.bf16.gmra.mrb[0].mxu0 %v512
      %v651 = vpop.f32.mrb[0].mxu0
      %v652 = vadd.f32 %v336, %v651
      %v653 = vpop.f32.mrb[0].mxu0
      %v654 = vpop.f32.mrb[0].mxu0
      %v655 = vadd.f32 %v336, %v654
      %v656 = vpop.f32.mrb[0].mxu0
      %657 = vmatprep.mubr.bf16.mxu0 0
      %658 = vmatmul.mubr.bf16.gmra.mrb[0].mxu0 %v515
      %v659 = vpop.f32.mrb[0].mxu0
      %v660 = vadd.f32 %v336, %v659
      %v661 = vpop.f32.mrb[0].mxu0
      %v662 = vpop.f32.mrb[0].mxu0
      %v663 = vadd.f32 %v336, %v662
      %v664 = vpop.f32.mrb[0].mxu0
      %665 = vmatprep.mubr.bf16.mxu0 0
      %666 = vmatmul.mubr.bf16.gmra.mrb[0].mxu0 %v518
      %v667 = vpop.f32.mrb[0].mxu0
      %v668 = vadd.f32 %v336, %v667
      %v669 = vpop.f32.mrb[0].mxu0
      %v670 = vpop.f32.mrb[0].mxu0
      %v671 = vadd.f32 %v336, %v670
      %v672 = vpop.f32.mrb[0].mxu0
      %673 = vmatprep.mubr.bf16.mxu0 0
      %674 = vmatmul.mubr.bf16.gmra.mrb[0].mxu0 %v521
      %v675 = vpop.f32.mrb[0].mxu0
      %v676 = vadd.f32 %v336, %v675
      %v677 = vpop.f32.mrb[0].mxu0
      %v678 = vpop.f32.mrb[0].mxu0
      %v679 = vadd.f32 %v336, %v678
      %v680 = vpop.f32.mrb[0].mxu0
      %681 = vmatprep.mubr.bf16.mxu0 0
      %682 = vmatmul.mubr.bf16.gmra.mrb[0].mxu0 %v524
      %v683 = vpop.f32.mrb[0].mxu0
      %v684 = vadd.f32 %v336, %v683
      %v685 = vpop.f32.mrb[0].mxu0
      %v686 = vpop.f32.mrb[0].mxu0
      %v687 = vadd.f32 %v336, %v686
      %v688 = vpop.f32.mrb[0].mxu0
      %689 = vmatprep.mubr.bf16.mxu0 0
      %690 = vmatmul.mubr.bf16.gmra.mrb[0].mxu0 %v527
      %v691 = vpop.f32.mrb[0].mxu0
      %v692 = vadd.f32 %v336, %v691
      %v693 = vpop.f32.mrb[0].mxu0
      %v694 = vpop.f32.mrb[0].mxu0
      %v695 = vadd.f32 %v336, %v694
      %v696 = vpop.f32.mrb[0].mxu0
      %697 = vmatprep.mubr.bf16.mxu0 0
      %698 = vmatmul.mubr.bf16.gmra.mrb[0].mxu0 %v530
      %v699 = vpop.f32.mrb[0].mxu0
      %v700 = vadd.f32 %v336, %v699
      %v701 = vpop.f32.mrb[0].mxu0
      %v702 = vpop.f32.mrb[0].mxu0
      %v703 = vadd.f32 %v336, %v702
      %v704 = vpop.f32.mrb[0].mxu0
      %705 = vmatprep.mubr.bf16.mxu0 0
      %706 = vmatmul.mubr.bf16.gmra.mrb[0].mxu0 %v533
      %v707 = vpop.f32.mrb[0].mxu0
      %v708 = vadd.f32 %v336, %v707
      %v709 = vpop.f32.mrb[0].mxu0
      %v710 = vpop.f32.mrb[0].mxu0
      %v711 = vadd.f32 %v336, %v710
      %v712 = vpop.f32.mrb[0].mxu0
      %713 = vmatprep.mubr.bf16.mxu0 0
      %714 = vmatmul.mubr.bf16.gmra.mrb[0].mxu0 %v536
      %v715 = vpop.f32.mrb[0].mxu0
      %v716 = vadd.f32 %v336, %v715
      %v717 = vpop.f32.mrb[0].mxu0
      %v718 = vpop.f32.mrb[0].mxu0
      %v719 = vadd.f32 %v336, %v718
      %v720 = vpop.f32.mrb[0].mxu0
      %721 = vmatprep.mubr.bf16.mxu0 0
      %722 = vmatmul.mubr.bf16.gmra.mrb[0].mxu0 %v539
      %v723 = vpop.f32.mrb[0].mxu0
      %v724 = vadd.f32 %v336, %v723
      %v725 = vpop.f32.mrb[0].mxu0
      %v726 = vpop.f32.mrb[0].mxu0
      %v727 = vadd.f32 %v336, %v726
      %v728 = vpop.f32.mrb[0].mxu0
      %729 = vmatprep.mubr.bf16.mxu0 0
      %730 = vmatmul.mubr.bf16.gmra.mrb[0].mxu0 %v542
      %v731 = vpop.f32.mrb[0].mxu0
      %v732 = vadd.f32 %v336, %v731
      %v733 = vpop.f32.mrb[0].mxu0
      %v734 = vpop.f32.mrb[0].mxu0
      %v735 = vadd.f32 %v336, %v734
      %v736 = vpop.f32.mrb[0].mxu0
      %737 = vmatprep.mubr.bf16.mxu0 0
      %738 = vmatmul.mubr.bf16.gmra.mrb[0].mxu0 %v545
      %v739 = vpop.f32.mrb[0].mxu0
      %v740 = vadd.f32 %v336, %v739
      %v741 = vpop.f32.mrb[0].mxu0
      %v742 = vpop.f32.mrb[0].mxu0
      %v743 = vadd.f32 %v336, %v742
      %v744 = vpop.f32.mrb[0].mxu0
      %745 = vmatprep.mubr.bf16.mxu0 0
      %746 = vmatmul.mubr.bf16.gmra.mrb[0].mxu0 %v548
      %v747 = vpop.f32.mrb[0].mxu0
      %v748 = vadd.f32 %v336, %v747
      %v749 = vpop.f32.mrb[0].mxu0
      %v750 = vpop.f32.mrb[0].mxu0
      %v751 = vadd.f32 %v336, %v750
      %v752 = vpop.f32.mrb[0].mxu0
      %753 = vmatprep.mubr.bf16.mxu0 0
      %754 = vmatmul.mubr.bf16.gmra.mrb[0].mxu0 %v551
      %v755 = vpop.f32.mrb[0].mxu0
      %v756 = vadd.f32 %v336, %v755
      %v757 = vpop.f32.mrb[0].mxu0
      %v758 = vpop.f32.mrb[0].mxu0
      %v759 = vadd.f32 %v336, %v758
      %v760 = vpop.f32.mrb[0].mxu0
      %761 = vmatprep.mubr.bf16.mxu0 0
      %762 = vmatmul.mubr.bf16.gmra.mrb[0].mxu0 %v554
      %v763 = vpop.f32.mrb[0].mxu0
      %v764 = vadd.f32 %v336, %v763
      %v765 = vpop.f32.mrb[0].mxu0
      %v766 = vpop.f32.mrb[0].mxu0
      %v767 = vadd.f32 %v336, %v766
      %v768 = vpop.f32.mrb[0].mxu0
      %769 = vmatprep.mubr.bf16.mxu0 0
      %770 = vmatmul.mubr.bf16.gmra.mrb[0].mxu0 %v557
      %v771 = vpop.f32.mrb[0].mxu0
      %v772 = vadd.f32 %v336, %v771
      %v773 = vpop.f32.mrb[0].mxu0
      %v774 = vpop.f32.mrb[0].mxu0
      %v775 = vadd.f32 %v336, %v774
      %v776 = vpop.f32.mrb[0].mxu0
      %777 = vmatprep.mubr.bf16.mxu0 0
      %778 = vmatmul.mubr.bf16.gmra.mrb[0].mxu0 %v560
      %v779 = vpop.f32.mrb[0].mxu0
      %v780 = vadd.f32 %v336, %v779
      %v781 = vpop.f32.mrb[0].mxu0
      %v782 = vpop.f32.mrb[0].mxu0
      %v783 = vadd.f32 %v336, %v782
      %v784 = vpop.f32.mrb[0].mxu0
      %785 = vmatprep.mubr.bf16.mxu0 0
      %786 = vmatmul.mubr.bf16.gmra.mrb[0].mxu0 %v563
      %v787 = vpop.f32.mrb[0].mxu0
      %v788 = vadd.f32 %v336, %v787
      %v789 = vpop.f32.mrb[0].mxu0
      %v790 = vpop.f32.mrb[0].mxu0
      %v791 = vadd.f32 %v336, %v790
      %v792 = vpop.f32.mrb[0].mxu0
      %793 = vmatprep.mubr.bf16.mxu0 0
      %794 = vmatmul.mubr.bf16.gmra.mrb[0].mxu0 %v566
      %v795 = vpop.f32.mrb[0].mxu0
      %v796 = vadd.f32 %v336, %v795
      %v797 = vpop.f32.mrb[0].mxu0
      %v798 = vpop.f32.mrb[0].mxu0
      %v799 = vadd.f32 %v336, %v798
      %v800 = vpop.f32.mrb[0].mxu0
      %801 = vmatprep.mubr.bf16.mxu0 0
      %802 = vmatmul.mubr.bf16.gmra.mrb[0].mxu0 %v569
      %v803 = vpop.f32.mrb[0].mxu0
      %v804 = vadd.f32 %v336, %v803
      %v805 = vpop.f32.mrb[0].mxu0
      %v806 = vpop.f32.mrb[0].mxu0
      %v807 = vadd.f32 %v336, %v806
      %v808 = vpop.f32.mrb[0].mxu0
      %809 = vmatprep.mubr.bf16.mxu0 0
      %810 = vmatmul.mubr.bf16.gmra.mrb[0].mxu0 %v572
      %v811 = vpop.f32.mrb[0].mxu0
      %v812 = vadd.f32 %v336, %v811
      %v813 = vpop.f32.mrb[0].mxu0
      %v814 = vpop.f32.mrb[0].mxu0
      %v815 = vadd.f32 %v336, %v814
      %v816 = vpop.f32.mrb[0].mxu0
      %817 = vmatprep.mubr.bf16.mxu0 0
      %818 = vmatmul.mubr.bf16.gmra.mrb[0].mxu0 %v575
      %v819 = vpop.f32.mrb[0].mxu0
      %v820 = vadd.f32 %v336, %v819
      %v821 = vpop.f32.mrb[0].mxu0
      %v822 = vpop.f32.mrb[0].mxu0
      %v823 = vadd.f32 %v336, %v822
      %v824 = vpop.f32.mrb[0].mxu0
      %825 = vmatprep.mubr.bf16.mxu0 0
      %826 = vmatmul.mubr.bf16.gmra.mrb[0].mxu0 %v578
      %v827 = vpop.f32.mrb[0].mxu0
      %v828 = vadd.f32 %v336, %v827
      %v829 = vpop.f32.mrb[0].mxu0
      %v830 = vpop.f32.mrb[0].mxu0
      %v831 = vadd.f32 %v336, %v830
      %v832 = vpop.f32.mrb[0].mxu0
      %833 = vmatprep.mubr.bf16.mxu0 0
      %834 = vmatmul.mubr.bf16.gmra.mrb[0].mxu0 %v581
      %v835 = vpop.f32.mrb[0].mxu0
      %v836 = vadd.f32 %v336, %v835
      %v837 = vpop.f32.mrb[0].mxu0
      %v838 = vpop.f32.mrb[0].mxu0
      %v839 = vadd.f32 %v336, %v838
      %v840 = vpop.f32.mrb[0].mxu0
      %841 = vmatprep.mubr.bf16.mxu0 0
      %842 = vmatmul.mubr.bf16.gmra.mrb[0].mxu0 %v584
      %v843 = vpop.f32.mrb[0].mxu0
      %v844 = vadd.f32 %v336, %v843
      %v845 = vpop.f32.mrb[0].mxu0
      %v846 = vpop.f32.mrb[0].mxu0
      %v847 = vadd.f32 %v336, %v846
      %v848 = vpop.f32.mrb[0].mxu0
      %849 = vmatprep.mubr.bf16.mxu0 0
      %850 = vmatmul.mubr.bf16.gmra.mrb[0].mxu0 %v587
      %v851 = vpop.f32.mrb[0].mxu0
      %v852 = vadd.f32 %v336, %v851
      %v853 = vpop.f32.mrb[0].mxu0
      %v854 = vpop.f32.mrb[0].mxu0
      %v855 = vadd.f32 %v336, %v854
      %v856 = vpop.f32.mrb[0].mxu0
      %857 = vmatprep.mubr.bf16.mxu0 0
      %858 = vmatmul.mubr.bf16.gmra.mrb[0].mxu0 %v590
      %v859 = vpop.f32.mrb[0].mxu0
      %v860 = vadd.f32 %v336, %v859
      %v861 = vpop.f32.mrb[0].mxu0
      %v862 = vpop.f32.mrb[0].mxu0
      %v863 = vadd.f32 %v336, %v862
      %v864 = vpop.f32.mrb[0].mxu0
      %865 = vmatprep.mubr.bf16.mxu0 0
      %866 = vmatmul.mubr.bf16.gmra.mrb[0].mxu0 %v593
      %v867 = vpop.f32.mrb[0].mxu0
      %v868 = vadd.f32 %v336, %v867
      %v869 = vpop.f32.mrb[0].mxu0
      %v870 = vpop.f32.mrb[0].mxu0
      %v871 = vadd.f32 %v336, %v870
      %v872 = vpop.f32.mrb[0].mxu0
      %873 = vmatprep.mubr.bf16.mxu0 0
      %874 = vmatmul.mubr.bf16.gmra.mrb[0].mxu0 %v596
      %v875 = vpop.f32.mrb[0].mxu0
      %v876 = vadd.f32 %v336, %v875
      %v877 = vpop.f32.mrb[0].mxu0
      %v878 = vpop.f32.mrb[0].mxu0
      %v879 = vadd.f32 %v336, %v878
      %v880 = vpop.f32.mrb[0].mxu0
      %881 = vmatprep.mubr.bf16.mxu0 0
      %882 = vmatmul.mubr.bf16.gmra.mrb[0].mxu0 %v599
      %v883 = vpop.f32.mrb[0].mxu0
      %v884 = vadd.f32 %v336, %v883
      %v885 = vpop.f32.mrb[0].mxu0
      %v886 = vpop.f32.mrb[0].mxu0
      %v887 = vadd.f32 %v336, %v886
      %v888 = vpop.f32.mrb[0].mxu0
      %889 = vdwg.mxu0
      %v890 = vmax.f32 %v636, 0.0
      %v891 = vmax.f32 %v639, 0.0
      %v892 = vmax.f32 %v644, 0.0
      %v893 = vmax.f32 %v647, 0.0
      %v894 = vmax.f32 %v652, 0.0
      %v895 = vmax.f32 %v655, 0.0
      %v896 = vmax.f32 %v660, 0.0
      %v897 = vmax.f32 %v663, 0.0
      %v898 = vmax.f32 %v668, 0.0
      %v899 = vmax.f32 %v671, 0.0
      %v900 = vmax.f32 %v676, 0.0
      %v901 = vmax.f32 %v679, 0.0
      %v902 = vmax.f32 %v684, 0.0
      %v903 = vmax.f32 %v687, 0.0
      %v904 = vmax.f32 %v692, 0.0
      %v905 = vmax.f32 %v695, 0.0
      %v906 = vmax.f32 %v700, 0.0
      %v907 = vmax.f32 %v703, 0.0
      %v908 = vmax.f32 %v708, 0.0
      %v909 = vmax.f32 %v711, 0.0
      %v910 = vmax.f32 %v716, 0.0
      %v911 = vmax.f32 %v719, 0.0
      %v912 = vmax.f32 %v724, 0.0
      %v913 = vmax.f32 %v727, 0.0
      %v914 = vmax.f32 %v732, 0.0
      %v915 = vmax.f32 %v735, 0.0
      %v916 = vmax.f32 %v740, 0.0
      %v917 = vmax.f32 %v743, 0.0
      %v918 = vmax.f32 %v748, 0.0
      %v919 = vmax.f32 %v751, 0.0
      %v920 = vmax.f32 %v756, 0.0
      %v921 = vmax.f32 %v759, 0.0
      %v922 = vmax.f32 %v764, 0.0
      %v923 = vmax.f32 %v767, 0.0
      %v924 = vmax.f32 %v772, 0.0
      %v925 = vmax.f32 %v775, 0.0
      %v926 = vmax.f32 %v780, 0.0
      %v927 = vmax.f32 %v783, 0.0
      %v928 = vmax.f32 %v788, 0.0
      %v929 = vmax.f32 %v791, 0.0
      %v930 = vmax.f32 %v796, 0.0
      %v931 = vmax.f32 %v799, 0.0
      %v932 = vmax.f32 %v804, 0.0
      %v933 = vmax.f32 %v807, 0.0
      %v934 = vmax.f32 %v812, 0.0
      %v935 = vmax.f32 %v815, 0.0
      %v936 = vmax.f32 %v820, 0.0
      %v937 = vmax.f32 %v823, 0.0
      %v938 = vmax.f32 %v828, 0.0
      %v939 = vmax.f32 %v831, 0.0
      %v940 = vmax.f32 %v836, 0.0
      %v941 = vmax.f32 %v839, 0.0
      %v942 = vmax.f32 %v844, 0.0
      %v943 = vmax.f32 %v847, 0.0
      %v944 = vmax.f32 %v852, 0.0
      %v945 = vmax.f32 %v855, 0.0
      %v946 = vmax.f32 %v860, 0.0
      %v947 = vmax.f32 %v863, 0.0
      %v948 = vmax.f32 %v868, 0.0
      %v949 = vmax.f32 %v871, 0.0
      %v950 = vmax.f32 %v876, 0.0
      %v951 = vmax.f32 %v879, 0.0
      %v952 = vmax.f32 %v884, 0.0
      %v953 = vmax.f32 %v887, 0.0
      %v954 = vpack.c.bf16 %v891, %v890
      %v955 = vpack.c.bf16 %v893, %v892
      %v956 = vpack.c.bf16 %v895, %v894
      %v957 = vpack.c.bf16 %v897, %v896
      %v958 = vpack.c.bf16 %v899, %v898
      %v959 = vpack.c.bf16 %v901, %v900
      %v960 = vpack.c.bf16 %v903, %v902
      %v961 = vpack.c.bf16 %v905, %v904
      %v962 = vpack.c.bf16 %v907, %v906
      %v963 = vpack.c.bf16 %v909, %v908
      %v964 = vpack.c.bf16 %v911, %v910
      %v965 = vpack.c.bf16 %v913, %v912
      %v966 = vpack.c.bf16 %v915, %v914
      %v967 = vpack.c.bf16 %v917, %v916
      %v968 = vpack.c.bf16 %v919, %v918
      %v969 = vpack.c.bf16 %v921, %v920
      %v970 = vpack.c.bf16 %v923, %v922
      %v971 = vpack.c.bf16 %v925, %v924
      %v972 = vpack.c.bf16 %v927, %v926
      %v973 = vpack.c.bf16 %v929, %v928
      %v974 = vpack.c.bf16 %v931, %v930
      %v975 = vpack.c.bf16 %v933, %v932
      %v976 = vpack.c.bf16 %v935, %v934
      %v977 = vpack.c.bf16 %v937, %v936
      %v978 = vpack.c.bf16 %v939, %v938
      %v979 = vpack.c.bf16 %v941, %v940
      %v980 = vpack.c.bf16 %v943, %v942
      %v981 = vpack.c.bf16 %v945, %v944
      %v982 = vpack.c.bf16 %v947, %v946
      %v983 = vpack.c.bf16 %v949, %v948
      %v984 = vpack.c.bf16 %v951, %v950
      %v985 = vpack.c.bf16 %v953, %v952
      %v986 = vld [vmem:[%s3] sm:$0x3]
      %v987 = vld [vmem:[%s4] sm:$0xf]
      %989 = vset.pattern.permute.xlu0 0
      %990 = vperm.xlu0 %989, %v987
      %v991 = vpop.permute.xlu0 %990
      %vm993 = vcmask 261120
      %v995 = vsel %vm993, %v986, 0
      %v998 = vsel %vm993, %v954, 0
      %v1001 = vsel %vm993, %v955, 0
      %v1004 = vsel %vm993, %v956, 0
      %v1007 = vsel %vm993, %v957, 0
      %v1010 = vsel %vm993, %v958, 0
      %v1013 = vsel %vm993, %v959, 0
      %v1016 = vsel %vm993, %v960, 0
      %v1019 = vsel %vm993, %v961, 0
      %v1022 = vsel %vm993, %v962, 0
      %v1025 = vsel %vm993, %v963, 0
      %v1028 = vsel %vm993, %v964, 0
      %v1031 = vsel %vm993, %v965, 0
      %v1034 = vsel %vm993, %v966, 0
      %v1037 = vsel %vm993, %v967, 0
      %v1040 = vsel %vm993, %v968, 0
      %v1043 = vsel %vm993, %v969, 0
      %v1046 = vsel %vm993, %v970, 0
      %v1049 = vsel %vm993, %v971, 0
      %v1052 = vsel %vm993, %v972, 0
      %v1055 = vsel %vm993, %v973, 0
      %v1058 = vsel %vm993, %v974, 0
      %v1061 = vsel %vm993, %v975, 0
      %v1064 = vsel %vm993, %v976, 0
      %v1067 = vsel %vm993, %v977, 0
      %v1070 = vsel %vm993, %v978, 0
      %v1073 = vsel %vm993, %v979, 0
      %v1076 = vsel %vm993, %v980, 0
      %v1079 = vsel %vm993, %v981, 0
      %v1082 = vsel %vm993, %v982, 0
      %v1085 = vsel %vm993, %v983, 0
      %v1088 = vsel %vm993, %v984, 0
      %v1091 = vsel %vm993, %v985, 0
      %1093 = vmatprep.subr.bf16.mxu0 0
      %1094 = vmatpush1.bf16.xpose.msra.mxu0 %v998
      %1095 = vmatprep.subr.bf16.mxu0 0
      %1096 = vmatpush1.bf16.xpose.msra.mxu0 %v1001
      %1097 = vmatprep.subr.bf16.mxu0 0
      %1098 = vmatpush1.bf16.xpose.msra.mxu0 %v1004
      %1099 = vmatprep.subr.bf16.mxu0 0
      %1100 = vmatpush1.bf16.xpose.msra.mxu0 %v1007
      %1101 = vmatprep.subr.bf16.mxu0 0
      %1102 = vmatpush1.bf16.xpose.msra.mxu0 %v1010
      %1103 = vmatprep.subr.bf16.mxu0 0
      %1104 = vmatpush1.bf16.xpose.msra.mxu0 %v1013
      %1105 = vmatprep.subr.bf16.mxu0 0
      %1106 = vmatpush1.bf16.xpose.msra.mxu0 %v1016
      %1107 = vmatprep.subr.bf16.mxu0 0
      %1108 = vmatpush1.bf16.xpose.msra.mxu0 %v1019
      %1109 = vmatprep.subr.bf16.mxu0 0
      %1110 = vmatpush1.bf16.xpose.msra.mxu0 %v1022
      %1111 = vmatprep.subr.bf16.mxu0 0
      %1112 = vmatpush1.bf16.xpose.msra.mxu0 %v1025
      %1113 = vmatprep.subr.bf16.mxu0 0
      %1114 = vmatpush1.bf16.xpose.msra.mxu0 %v1028
      %1115 = vmatprep.subr.bf16.mxu0 0
      %1116 = vmatpush1.bf16.xpose.msra.mxu0 %v1031
      %1117 = vmatprep.subr.bf16.mxu0 0
      %1118 = vmatpush1.bf16.xpose.msra.mxu0 %v1034
      %1119 = vmatprep.subr.bf16.mxu0 0
      %1120 = vmatpush1.bf16.xpose.msra.mxu0 %v1037
      %1121 = vmatprep.subr.bf16.mxu0 0
      %1122 = vmatpush1.bf16.xpose.msra.mxu0 %v1040
      %1123 = vmatprep.subr.bf16.mxu0 0
      %1124 = vmatpush1.bf16.xpose.msra.mxu0 %v1043
      %1125 = vmatprep.mubr.bf16.mxu0 0
      %1126 = vmatmul.mubr.bf16.gmra.mrb[0].mxu0 %v995
      %v1127 = vpop.f32.mrb[0].mxu0
      %v1128 = vadd.f32 %v991, %v1127
      %v1129 = vpop.f32.mrb[0].mxu0
      %v1130 = vadd.f32 %v991, %v1129
      %v1131 = vpop.f32.mrb[0].mxu0
      %v1132 = vpop.f32.mrb[0].mxu0
      %1133 = vdwg.mxu0
      %1134 = vmatprep.subr.bf16.mxu0 0
      %1135 = vmatpush1.bf16.xpose.msra.mxu0 %v1046
      %1136 = vmatprep.subr.bf16.mxu0 0
      %1137 = vmatpush1.bf16.xpose.msra.mxu0 %v1049
      %1138 = vmatprep.subr.bf16.mxu0 0
      %1139 = vmatpush1.bf16.xpose.msra.mxu0 %v1052
      %1140 = vmatprep.subr.bf16.mxu0 0
      %1141 = vmatpush1.bf16.xpose.msra.mxu0 %v1055
      %1142 = vmatprep.subr.bf16.mxu0 0
      %1143 = vmatpush1.bf16.xpose.msra.mxu0 %v1058
      %1144 = vmatprep.subr.bf16.mxu0 0
      %1145 = vmatpush1.bf16.xpose.msra.mxu0 %v1061
      %1146 = vmatprep.subr.bf16.mxu0 0
      %1147 = vmatpush1.bf16.xpose.msra.mxu0 %v1064
      %1148 = vmatprep.subr.bf16.mxu0 0
      %1149 = vmatpush1.bf16.xpose.msra.mxu0 %v1067
      %1150 = vmatprep.subr.bf16.mxu0 0
      %1151 = vmatpush1.bf16.xpose.msra.mxu0 %v1070
      %1152 = vmatprep.subr.bf16.mxu0 0
      %1153 = vmatpush1.bf16.xpose.msra.mxu0 %v1073
      %1154 = vmatprep.subr.bf16.mxu0 0
      %1155 = vmatpush1.bf16.xpose.msra.mxu0 %v1076
      %1156 = vmatprep.subr.bf16.mxu0 0
      %1157 = vmatpush1.bf16.xpose.msra.mxu0 %v1079
      %1158 = vmatprep.subr.bf16.mxu0 0
      %1159 = vmatpush1.bf16.xpose.msra.mxu0 %v1082
      %1160 = vmatprep.subr.bf16.mxu0 0
      %1161 = vmatpush1.bf16.xpose.msra.mxu0 %v1085
      %1162 = vmatprep.subr.bf16.mxu0 0
      %1163 = vmatpush1.bf16.xpose.msra.mxu0 %v1088
      %1164 = vmatprep.subr.bf16.mxu0 0
      %1165 = vmatpush1.bf16.xpose.msra.mxu0 %v1091
      %1166 = vmatprep.mubr.bf16.mxu0 0
      %1167 = vmatmul.mubr.bf16.gmra.mrb[0].mxu0 %v995
      %v1168 = vpop.f32.mrb[0].mxu0
      %v1169 = vadd.f32 %v991, %v1168
      %v1170 = vpop.f32.mrb[0].mxu0
      %v1171 = vadd.f32 %v991, %v1170
      %v1172 = vpop.f32.mrb[0].mxu0
      %v1173 = vpop.f32.mrb[0].mxu0
      %1174 = vdwg.mxu0
      %v1175 = vpack.c.bf16 %v1128, %v1128
      %v1176 = vpack.c.bf16 %v1130, %v1130
      %v1177 = vpack.c.bf16 %v1169, %v1169
      %v1178 = vpack.c.bf16 %v1171, %v1171
      %v1183 = vcombine.low %v1175, %v1176
      %v1184 = vcombine.low %v1177, %v1178
      %v1186 = vunpack.c.l.s4 1983009808
      %v1187 = vunpack.c.0.s8 %v1186
      %v1188 = vlaneseq
      %v1189 = vshrl.u32 %v1188, 7
      %v1190 = vsub.s32 %v1187, %v1189
      %v1191 = vrot.slane %v1183, %v1190
      %v1193 = vunpack.c.l.s4 1983009808
      %v1194 = vunpack.c.0.s8 %v1193
      %v1195 = vlaneseq
      %v1196 = vshrl.u32 %v1195, 7
      %v1197 = vsub.s32 %v1194, %v1196
      %v1198 = vrot.slane %v1184, %v1197
      %v1199 = vcombine.low %v1191, %v1198
      %1201 = vst [vmem:[%s262] sm:$0xff] %v1199
      %s1202 = smul.u32 4, %s21
      %p1203 = scmp.lt.s32.totalorder %s20, 1
      %s1204 = scalar_select %p1203, %s20, 1
      %p1205 = scmp.lt.s32.totalorder %s1202, 3
      %s1206 = scalar_select %p1205, %s1202, 3
      %s1207 = smul.addr %s1204, 4
      %s1208 = sadd.s32 %s1206, %s1207
      %s1209 = smul.addr %s1208, 2
      %s1210 = scalar_lea.vmem %s5, %s1209
      // Predicated region
      $region41: #{cylinder3d_forward.3} parent=39 // pred_check
        %p1211 = pneg %p160
      $region42: #{cylinder3d_forward.3} parent=39 // pred_check_branch
        %1213 = sbr.rel (%p1211) target = $region44
      $region43: #{cylinder3d_forward.3} parent=39 // pred_region
        %s1214 = smul.u32 4, %s21
      $region44: #{cylinder3d_forward.3} parent=39 // pred_fallthru
        _
    $region40: #{cylinder3d_forward.3} parent=5 // pred_fallthru
      _
    %p1215 = scmp.le.s32.totalorder 2, %s11
    // Predicated region
    $region45: #{cylinder3d_forward.3} parent=5 // pred_check
      %p1216 = pneg %p1215
    $region46: #{cylinder3d_forward.3} parent=5 // pred_check_branch
      %1218 = sbr.rel (%p1216) target = $region48
    $region47: #{cylinder3d_forward.3} parent=5 // pred_region
      %s1219 = ssub.s32 %s11, 2
      // Predicated region
      $region49: #{cylinder3d_forward.3} parent=47 // pred_check
        %p1220 = pneg %p166
      $region50: #{cylinder3d_forward.3} parent=47 // pred_check_branch
        %1222 = sbr.rel (%p1220) target = $region52
      $region51: #{cylinder3d_forward.3} parent=47 // pred_region
        %s1223 = smul.u32 4, %s23
        %p1224 = scmp.lt.s32.totalorder %s22, 1
        %s1225 = scalar_select %p1224, %s22, 1
        %p1226 = scmp.lt.s32.totalorder %s1223, 3
        %s1227 = scalar_select %p1226, %s1223, 3
        %s1228 = smul.addr %s1225, 4
        %s1229 = sadd.s32 %s1227, %s1228
        %s1230 = smul.addr %s1229, 2
        %s1231 = scalar_lea.vmem %s5, %s1230
      $region52: #{cylinder3d_forward.3} parent=47 // pred_fallthru
        _
    $region48: #{cylinder3d_forward.3} parent=5 // pred_fallthru
      _
  $region6: #{cylinder3d_forward.3} parent=0 // loop_footer
    %s15 = sadd.s32 1, %s11
  $region7: #{cylinder3d_forward.3} parent=0 // loop_footer_branch
    %10 = sbr.rel target = $region3
  $region8: #{cylinder3d_forward.3} parent=0 // loop_exit
    _

</llo_original>
